<compile_context>
chip_gen: v5e
topology: v5e:2x2
jax: 0.10.0
libtpu: 0.0.40
codegen_flags: <defaults>
</compile_context>

<pallas_src>
import functools
import math

import jax
import jax.numpy as jnp
from jax import lax
from jax.experimental import pallas as pl
from jax.experimental.pallas import tpu as pltpu


def _layernorm(h, g, b, eps):
    mu = jnp.mean(h, axis=-1, keepdims=True)
    var = jnp.mean(jnp.square(h - mu), axis=-1, keepdims=True)
    return (h - mu) * lax.rsqrt(var + eps) * g + b


def _transformer_block_kernel(
    xs_ref,
    wq_ref, bq_ref,
    wk_ref, bk_ref,
    wv_ref, bv_ref,
    wo_ref, bo_ref,
    g1_ref, beta1_ref,
    w1_ref, bff1_ref,
    w2_ref, bff2_ref,
    g2_ref, beta2_ref,
    o_ref,
    kh_sc, vh_sc,
    *, num_heads, d_k, q_block, kv_block, eps=1e-5,
):
    H = num_heads
    Tq = q_block
    Tk = kv_block
    S = xs_ref.shape[1]
    D = xs_ref.shape[2]
    n_kv = S // Tk

    qi = pl.program_id(1)

    # --- K/V projections: computed once per batch element, cached in scratch ---
    @pl.when(qi == 0)
    def _():
        xs_b = xs_ref[0].astype(jnp.bfloat16)
        k = jnp.dot(xs_b, wk_ref[...], preferred_element_type=jnp.float32) + bk_ref[...]
        v = jnp.dot(xs_b, wv_ref[...], preferred_element_type=jnp.float32) + bv_ref[...]
        kh_sc[...] = jnp.transpose(k.reshape(S, H, d_k), (1, 0, 2)).astype(jnp.bfloat16)
        vh_sc[...] = jnp.transpose(v.reshape(S, H, d_k), (1, 0, 2)).astype(jnp.bfloat16)

    # --- query rows / residual sliced from the resident sequence block ---
    q_start = pl.multiple_of(qi * Tq, Tq)
    xq = xs_ref[0, pl.ds(q_start, Tq), :].astype(jnp.float32)   # (Tq, D)
    xq_b = xq.astype(jnp.bfloat16)

    # Q projection (1/sqrt(d_k) already folded into wq/bq host-side).
    q = jnp.dot(xq_b, wq_ref[...], preferred_element_type=jnp.float32) + bq_ref[...]
    qh = jnp.transpose(q.reshape(Tq, H, d_k), (1, 0, 2)).astype(jnp.bfloat16)  # (H,Tq,d_k)

    # --- KV-block online-softmax attention (flash-style) ---
    m0 = jnp.full((H, Tq, 1), -jnp.inf, jnp.float32)
    l0 = jnp.zeros((H, Tq, 1), jnp.float32)
    acc0 = jnp.zeros((H, Tq, d_k), jnp.float32)

    def kv_step(kb, carry):
        m_i, l_i, acc = carry
        start = pl.multiple_of(kb * Tk, Tk)
        k_blk = kh_sc[:, pl.ds(start, Tk), :]                    # (H, Tk, d_k) bf16
        v_blk = vh_sc[:, pl.ds(start, Tk), :]
        s = jnp.einsum("hqd,hkd->hqk", qh, k_blk,
                       preferred_element_type=jnp.float32)       # (H, Tq, Tk)
        m_new = jnp.maximum(m_i, s.max(axis=-1, keepdims=True))
        alpha = jnp.exp(m_i - m_new)
        p = jnp.exp(s - m_new)
        l_new = alpha * l_i + p.sum(axis=-1, keepdims=True)
        acc_new = alpha * acc + jnp.einsum(
            "hqk,hkd->hqd", p.astype(jnp.bfloat16), v_blk,
            preferred_element_type=jnp.float32)
        return m_new, l_new, acc_new

    _, l_fin, acc_fin = lax.fori_loop(0, n_kv, kv_step, (m0, l0, acc0))
    ctx = acc_fin * pl.reciprocal(l_fin, approx=True)            # (H, Tq, d_k)
    attn = jnp.transpose(ctx, (1, 0, 2)).reshape(Tq, D)

    # --- output projection ---
    attn_out = jnp.dot(attn.astype(jnp.bfloat16), wo_ref[...],
                       preferred_element_type=jnp.float32) + bo_ref[...]

    # --- residual + LayerNorm 1 ---
    y1 = _layernorm(xq + attn_out, g1_ref[...], beta1_ref[...], eps)

    # --- feed-forward: Linear -> ReLU -> Linear ---
    f = jnp.dot(y1.astype(jnp.bfloat16), w1_ref[...],
                preferred_element_type=jnp.float32) + bff1_ref[...]
    f = jnp.maximum(f, 0.0)
    f = jnp.dot(f.astype(jnp.bfloat16), w2_ref[...],
                preferred_element_type=jnp.float32) + bff2_ref[...]

    # --- residual + LayerNorm 2 ---
    y2 = _layernorm(y1 + f, g2_ref[...], beta2_ref[...], eps)

    o_ref[0] = y2.astype(o_ref.dtype)


def _physical_vmem_bytes():
    try:
        return int(pltpu.get_tpu_info().vmem_capacity_bytes)
    except Exception:
        return 64 << 20   # conservative default: v7x per-TensorCore VMEM


def _pick_q_block(S, phys_vmem):
    """Query-tile size: generation-aware target, multiple of 128 when tiling."""
    target = 512 if phys_vmem >= (100 << 20) else 256   # v5e/v6e: bigger tiles fit
    if S <= target:
        return S
    for t in (target, 256, 128):
        if S % t == 0:
            return t
    return S


def _pick_kv_block(S, target=512):
    if S <= target:
        return S
    for t in (target, 256, 128):
        if S % t == 0:
            return t
    return S


def _vmem_limit_bytes(S, Tq, Tk, D, d_ff, H, phys_vmem):
    bf16, f32 = 2, 4
    d_k = D // H
    weights = (4 * D * D + 2 * D * d_ff) * bf16          # bf16 matmul weights, Buffered(1)
    small = (9 * D + d_ff) * f32                         # biases + LN params, Buffered(1)
    x_blk = S * D * f32 * 2                              # double-buffered sequence block
    out_blk = Tq * D * f32 * 2                           # double-buffered output tile
    kv_cache = 2 * H * S * d_k * bf16                    # persistent K/V scratch
    scores = H * Tq * Tk * (2 * f32 + bf16)              # s, p (f32) + p (bf16) per KV block
    acts = Tq * D * f32 * 6 + H * Tq * d_k * (f32 + bf16) + Tq * d_ff * f32 * 2
    est = weights + small + x_blk + out_blk + kv_cache + scores + acts
    est = int(est * 1.5) + (4 << 20)                     # headroom + slack
    cap = phys_vmem - (4 << 20)                          # never exceed physical VMEM
    return max(16 << 20, min(est, cap))


def transformer_block(x, params, num_heads, eps=1e-5):
    B, S, D = x.shape
    d_ff = params["w1"].shape[1]
    d_k = D // num_heads

    phys_vmem = _physical_vmem_bytes()
    Tq = _pick_q_block(S, phys_vmem)
    Tk = _pick_kv_block(S)
    n_q = S // Tq

    # Fold the 1/sqrt(d_k) attention scale into W_q / b_q (one-time constant
    # transform), then cast matmul weights to bf16; biases/LN params stay f32.
    inv_sqrt_dk = 1.0 / math.sqrt(d_k)
    pp = dict(params)
    pp["wq"] = params["wq"] * inv_sqrt_dk
    pp["bq"] = params["bq"] * inv_sqrt_dk

    w_names = ("wq", "wk", "wv", "wo", "w1", "w2")
    param_order = [
        "wq", "bq", "wk", "bk", "wv", "bv", "wo", "bo",
        "g1", "beta1", "w1", "bff1", "w2", "bff2", "g2", "beta2",
    ]
    param_vals = [
        pp[n].astype(jnp.bfloat16) if n in w_names else pp[n].astype(jnp.float32)
        for n in param_order
    ]

    kernel = functools.partial(
        _transformer_block_kernel,
        num_heads=num_heads, d_k=d_k, q_block=Tq, kv_block=Tk, eps=eps)

    def const_spec(p):
        # Invariant block: fetched once, reused every step, single-buffered.
        return pl.BlockSpec(p.shape, lambda b, qi: (0, 0),
                            pipeline_mode=pl.Buffered(1))

    in_specs = (
        # Whole sequence block; constant index across qi -> resident per batch.
        [pl.BlockSpec((1, S, D), lambda b, qi: (b, 0, 0))]
        + [const_spec(p) for p in param_vals]
    )
    out_spec = pl.BlockSpec((1, Tq, D), lambda b, qi: (b, qi, 0))

    return pl.pallas_call(
        kernel,
        out_shape=jax.ShapeDtypeStruct((B, S, D), x.dtype),
        grid_spec=pltpu.PrefetchScalarGridSpec(
            num_scalar_prefetch=0,
            grid=(B, n_q),
            in_specs=in_specs,
            out_specs=out_spec,
            scratch_shapes=[
                pltpu.VMEM((num_heads, S, d_k), jnp.bfloat16),   # K cache (head-major)
                pltpu.VMEM((num_heads, S, d_k), jnp.bfloat16),   # V cache (head-major)
            ],
        ),
        compiler_params=pltpu.CompilerParams(
            # qi carries the K/V scratch -> "arbitrary"; batch axis stays parallel.
            dimension_semantics=("parallel", "arbitrary"),
            vmem_limit_bytes=_vmem_limit_bytes(S, Tq, Tk, D, d_ff, num_heads, phys_vmem),
        ),
    )(x, *param_vals)


def transformer_block_ref(x, params, num_heads):
    """Plain-JAX f32 reference matching the PyTorch forward (eval mode)."""
    B, S, D = x.shape
    d_k = D // num_heads
    q = x @ params["wq"] + params["bq"]
    k = x @ params["wk"] + params["bk"]
    v = x @ params["wv"] + params["bv"]

    def split(t):
        return t.reshape(B, S, num_heads, d_k).transpose(0, 2, 1, 3)

    qh, kh, vh = split(q), split(k), split(v)
    scores = jnp.einsum("bhqd,bhkd->bhqk", qh, kh) / math.sqrt(d_k)
    p = jax.nn.softmax(scores, axis=-1)
    attn = jnp.einsum("bhqk,bhkd->bhqd", p, vh)
    attn = attn.transpose(0, 2, 1, 3).reshape(B, S, D)
    attn_out = attn @ params["wo"] + params["bo"]

    def layernorm(t, g, b, eps=1e-5):
        mu = jnp.mean(t, axis=-1, keepdims=True)
        var = jnp.mean((t - mu) ** 2, axis=-1, keepdims=True)
        return (t - mu) / jnp.sqrt(var + eps) * g + b

    y1 = layernorm(x + attn_out, params["g1"], params["beta1"])
    f = jnp.maximum(y1 @ params["w1"] + params["bff1"], 0.0)
    f = f @ params["w2"] + params["bff2"]
    y2 = layernorm(y1 + f, params["g2"], params["beta2"])
    return y2


def init_params(key, d_model, d_ff):
    keys = jax.random.split(key, 12)
    s = 1.0 / math.sqrt(d_model)
    sf = 1.0 / math.sqrt(d_ff)
    return {
        # attention projections, stored as [in, out]
        "wq": jax.random.uniform(keys[0], (d_model, d_model), jnp.float32, -s, s),
        "bq": jax.random.uniform(keys[1], (1, d_model), jnp.float32, -s, s),
        "wk": jax.random.uniform(keys[2], (d_model, d_model), jnp.float32, -s, s),
        "bk": jax.random.uniform(keys[3], (1, d_model), jnp.float32, -s, s),
        "wv": jax.random.uniform(keys[4], (d_model, d_model), jnp.float32, -s, s),
        "bv": jax.random.uniform(keys[5], (1, d_model), jnp.float32, -s, s),
        "wo": jax.random.uniform(keys[6], (d_model, d_model), jnp.float32, -s, s),
        "bo": jax.random.uniform(keys[7], (1, d_model), jnp.float32, -s, s),
        # layernorm 1
        "g1": jnp.ones((1, d_model), jnp.float32),
        "beta1": jnp.zeros((1, d_model), jnp.float32),
        # feed-forward
        "w1": jax.random.uniform(keys[8], (d_model, d_ff), jnp.float32, -s, s),
        "bff1": jax.random.uniform(keys[9], (1, d_ff), jnp.float32, -s, s),
        "w2": jax.random.uniform(keys[10], (d_ff, d_model), jnp.float32, -sf, sf),
        "bff2": jax.random.uniform(keys[11], (1, d_model), jnp.float32, -sf, sf),
        # layernorm 2
        "g2": jnp.ones((1, d_model), jnp.float32),
        "beta2": jnp.zeros((1, d_model), jnp.float32),
    }


if __name__ == "__main__":
    B, S, d_model, num_heads, d_ff = 2, 8, 32, 4, 64

    key = jax.random.PRNGKey(0)
    kx, kp = jax.random.split(key)
    x = jax.random.normal(kx, (B, S, d_model), jnp.float32)
    params = init_params(kp, d_model, d_ff)

    out = jax.block_until_ready(transformer_block(x, params, num_heads))
    ref = transformer_block_ref(x, params, num_heads)

    assert out.shape == (B, S, d_model)
    err = float(jnp.max(jnp.abs(out - ref)))
    # bf16 MXU operands + approx reciprocal loosen the tolerance vs a pure-f32 kernel.
    assert err < 5e-2, f"max abs diff {err}"
    print("KERNEL_OK")
</pallas_src>

<mosaic_0001>
module attributes {stable_mosaic.version = 11 : i64} {
  func.func @_transformer_block_kernel(%arg0: i32, %arg1: i32, %arg2: memref<1x8x32xf32, #tpu.memory_space<vmem>>, %arg3: memref<32x32xbf16, #tpu.memory_space<vmem>>, %arg4: memref<1x32xf32, #tpu.memory_space<vmem>>, %arg5: memref<32x32xbf16, #tpu.memory_space<vmem>>, %arg6: memref<1x32xf32, #tpu.memory_space<vmem>>, %arg7: memref<32x32xbf16, #tpu.memory_space<vmem>>, %arg8: memref<1x32xf32, #tpu.memory_space<vmem>>, %arg9: memref<32x32xbf16, #tpu.memory_space<vmem>>, %arg10: memref<1x32xf32, #tpu.memory_space<vmem>>, %arg11: memref<1x32xf32, #tpu.memory_space<vmem>>, %arg12: memref<1x32xf32, #tpu.memory_space<vmem>>, %arg13: memref<32x64xbf16, #tpu.memory_space<vmem>>, %arg14: memref<1x64xf32, #tpu.memory_space<vmem>>, %arg15: memref<64x32xbf16, #tpu.memory_space<vmem>>, %arg16: memref<1x32xf32, #tpu.memory_space<vmem>>, %arg17: memref<1x32xf32, #tpu.memory_space<vmem>>, %arg18: memref<1x32xf32, #tpu.memory_space<vmem>>, %arg19: memref<1x8x32xf32, #tpu.memory_space<vmem>>, %arg20: memref<4x8x8xbf16, #tpu.memory_space<vmem>>, %arg21: memref<4x8x8xbf16, #tpu.memory_space<vmem>>) attributes {dimension_semantics = [#tpu.dimension_semantics<parallel>, #tpu.dimension_semantics<arbitrary>], iteration_bounds = array<i64: 2, 1>, scalar_prefetch = 0 : i64, scratch_operands = 2 : i64, tpu.core_type = #tpu.core_type<tc>, window_params = [{transform_indices = @transform_0, window_bounds = array<i64: 1, 8, 32>}, {pipeline_mode = #tpu.pipeline_mode<synchronous>, transform_indices = @transform_1, window_bounds = array<i64: 32, 32>}, {pipeline_mode = #tpu.pipeline_mode<synchronous>, transform_indices = @transform_2, window_bounds = array<i64: 1, 32>}, {pipeline_mode = #tpu.pipeline_mode<synchronous>, transform_indices = @transform_3, window_bounds = array<i64: 32, 32>}, {pipeline_mode = #tpu.pipeline_mode<synchronous>, transform_indices = @transform_4, window_bounds = array<i64: 1, 32>}, {pipeline_mode = #tpu.pipeline_mode<synchronous>, transform_indices = @transform_5, window_bounds = array<i64: 32, 32>}, {pipeline_mode = #tpu.pipeline_mode<synchronous>, transform_indices = @transform_6, window_bounds = array<i64: 1, 32>}, {pipeline_mode = #tpu.pipeline_mode<synchronous>, transform_indices = @transform_7, window_bounds = array<i64: 32, 32>}, {pipeline_mode = #tpu.pipeline_mode<synchronous>, transform_indices = @transform_8, window_bounds = array<i64: 1, 32>}, {pipeline_mode = #tpu.pipeline_mode<synchronous>, transform_indices = @transform_9, window_bounds = array<i64: 1, 32>}, {pipeline_mode = #tpu.pipeline_mode<synchronous>, transform_indices = @transform_10, window_bounds = array<i64: 1, 32>}, {pipeline_mode = #tpu.pipeline_mode<synchronous>, transform_indices = @transform_11, window_bounds = array<i64: 32, 64>}, {pipeline_mode = #tpu.pipeline_mode<synchronous>, transform_indices = @transform_12, window_bounds = array<i64: 1, 64>}, {pipeline_mode = #tpu.pipeline_mode<synchronous>, transform_indices = @transform_13, window_bounds = array<i64: 64, 32>}, {pipeline_mode = #tpu.pipeline_mode<synchronous>, transform_indices = @transform_14, window_bounds = array<i64: 1, 32>}, {pipeline_mode = #tpu.pipeline_mode<synchronous>, transform_indices = @transform_15, window_bounds = array<i64: 1, 32>}, {pipeline_mode = #tpu.pipeline_mode<synchronous>, transform_indices = @transform_16, window_bounds = array<i64: 1, 32>}, {transform_indices = @transform_17, window_bounds = array<i64: 1, 8, 32>}]} {
    %c0_i32 = arith.constant 0 : i32
    %0 = arith.cmpi eq, %arg1, %c0_i32 : i32
    %1 = arith.extui %0 : i1 to i32
    %c0_i32_0 = arith.constant 0 : i32
    %2 = arith.cmpi ne, %1, %c0_i32_0 : i32
    scf.if %2 {
      %c0_56 = arith.constant 0 : index
      %c0_57 = arith.constant 0 : index
      %c0_58 = arith.constant 0 : index
      %122 = vector.load %arg2[%c0_56, %c0_57, %c0_58] : memref<1x8x32xf32, #tpu.memory_space<vmem>>, vector<1x8x32xf32>
      %123 = vector.shape_cast %122 : vector<1x8x32xf32> to vector<8x32xf32>
      %124 = arith.truncf %123 : vector<8x32xf32> to vector<8x32xbf16>
      %c0_59 = arith.constant 0 : index
      %c0_60 = arith.constant 0 : index
      %125 = vector.load %arg5[%c0_59, %c0_60] : memref<32x32xbf16, #tpu.memory_space<vmem>>, vector<32x32xbf16>
      %cst_61 = arith.constant dense<0.000000e+00> : vector<8x32xf32>
      %126 = tpu.matmul %124, %125, %cst_61 {dimension_numbers = #tpu.dot_dimension_numbers<[1], [0], [0], [1], [0, 0, 1, 1], [], []>} : vector<8x32xbf16>, vector<32x32xbf16>, vector<8x32xf32> -> vector<8x32xf32>
      %c0_62 = arith.constant 0 : index
      %c0_63 = arith.constant 0 : index
      %127 = vector.load %arg6[%c0_62, %c0_63] : memref<1x32xf32, #tpu.memory_space<vmem>>, vector<1x32xf32>
      %128 = vector.broadcast %127 : vector<1x32xf32> to vector<8x32xf32>
      %129 = arith.addf %126, %128 : vector<8x32xf32>
      %c0_64 = arith.constant 0 : index
      %c0_65 = arith.constant 0 : index
      %130 = vector.load %arg7[%c0_64, %c0_65] : memref<32x32xbf16, #tpu.memory_space<vmem>>, vector<32x32xbf16>
      %cst_66 = arith.constant dense<0.000000e+00> : vector<8x32xf32>
      %131 = tpu.matmul %124, %130, %cst_66 {dimension_numbers = #tpu.dot_dimension_numbers<[1], [0], [0], [1], [0, 0, 1, 1], [], []>} : vector<8x32xbf16>, vector<32x32xbf16>, vector<8x32xf32> -> vector<8x32xf32>
      %c0_67 = arith.constant 0 : index
      %c0_68 = arith.constant 0 : index
      %132 = vector.load %arg8[%c0_67, %c0_68] : memref<1x32xf32, #tpu.memory_space<vmem>>, vector<1x32xf32>
      %133 = vector.broadcast %132 : vector<1x32xf32> to vector<8x32xf32>
      %134 = arith.addf %131, %133 : vector<8x32xf32>
      %135 = vector.shape_cast %129 : vector<8x32xf32> to vector<8x4x8xf32>
      %136 = tpu.transpose %135, [1, 0, 2] : vector<8x4x8xf32> -> vector<4x8x8xf32>
      %137 = arith.truncf %136 : vector<4x8x8xf32> to vector<4x8x8xbf16>
      %c0_69 = arith.constant 0 : index
      %c0_70 = arith.constant 0 : index
      %c0_71 = arith.constant 0 : index
      %138 = vector.load %arg20[%c0_69, %c0_70, %c0_71] : memref<4x8x8xbf16, #tpu.memory_space<vmem>>, vector<4x8x8xbf16>
      tpu.vector_store %arg20[%c0_69, %c0_70, %c0_71], %137 {strides = array<i32>} : memref<4x8x8xbf16, #tpu.memory_space<vmem>>, vector<4x8x8xbf16>,
      %139 = vector.shape_cast %134 : vector<8x32xf32> to vector<8x4x8xf32>
      %140 = tpu.transpose %139, [1, 0, 2] : vector<8x4x8xf32> -> vector<4x8x8xf32>
      %141 = arith.truncf %140 : vector<4x8x8xf32> to vector<4x8x8xbf16>
      %c0_72 = arith.constant 0 : index
      %c0_73 = arith.constant 0 : index
      %c0_74 = arith.constant 0 : index
      %142 = vector.load %arg21[%c0_72, %c0_73, %c0_74] : memref<4x8x8xbf16, #tpu.memory_space<vmem>>, vector<4x8x8xbf16>
      tpu.vector_store %arg21[%c0_72, %c0_73, %c0_74], %141 {strides = array<i32>} : memref<4x8x8xbf16, #tpu.memory_space<vmem>>, vector<4x8x8xbf16>,
    } else {
    }
    %c8_i32 = arith.constant 8 : i32
    %3 = arith.muli %arg1, %c8_i32 : i32
    %4 = tpu.assume_multiple %3, 8 : i32
    %c0 = arith.constant 0 : index
    %5 = arith.index_cast %4 : i32 to index
    %c0_1 = arith.constant 0 : index
    %6 = vector.load %arg2[%c0, %5, %c0_1] : memref<1x8x32xf32, #tpu.memory_space<vmem>>, vector<1x8x32xf32>
    %7 = vector.shape_cast %6 : vector<1x8x32xf32> to vector<8x32xf32>
    %8 = arith.truncf %7 : vector<8x32xf32> to vector<8x32xbf16>
    %c0_2 = arith.constant 0 : index
    %c0_3 = arith.constant 0 : index
    %9 = vector.load %arg3[%c0_2, %c0_3] : memref<32x32xbf16, #tpu.memory_space<vmem>>, vector<32x32xbf16>
    %cst = arith.constant dense<0.000000e+00> : vector<8x32xf32>
    %10 = tpu.matmul %8, %9, %cst {dimension_numbers = #tpu.dot_dimension_numbers<[1], [0], [0], [1], [0, 0, 1, 1], [], []>} : vector<8x32xbf16>, vector<32x32xbf16>, vector<8x32xf32> -> vector<8x32xf32>
    %c0_4 = arith.constant 0 : index
    %c0_5 = arith.constant 0 : index
    %11 = vector.load %arg4[%c0_4, %c0_5] : memref<1x32xf32, #tpu.memory_space<vmem>>, vector<1x32xf32>
    %12 = vector.broadcast %11 : vector<1x32xf32> to vector<8x32xf32>
    %13 = arith.addf %10, %12 : vector<8x32xf32>
    %14 = vector.shape_cast %13 : vector<8x32xf32> to vector<8x4x8xf32>
    %15 = tpu.transpose %14, [1, 0, 2] : vector<8x4x8xf32> -> vector<4x8x8xf32>
    %16 = arith.truncf %15 : vector<4x8x8xf32> to vector<4x8x8xbf16>
    %cst_6 = arith.constant 0xFF800000 : f32
    %17 = vector.broadcast %cst_6 : f32 to vector<4x8x1xf32>
    %cst_7 = arith.constant 0.000000e+00 : f32
    %18 = vector.broadcast %cst_7 : f32 to vector<4x8x1xf32>
    %cst_8 = arith.constant 0.000000e+00 : f32
    %19 = vector.broadcast %cst_8 : f32 to vector<4x8x8xf32>
    %c0_i32_9 = arith.constant 0 : i32
    %c8_i32_10 = arith.constant 8 : i32
    %20 = arith.muli %c0_i32_9, %c8_i32_10 : i32
    %21 = tpu.assume_multiple %20, 8 : i32
    %c0_11 = arith.constant 0 : index
    %22 = arith.index_cast %21 : i32 to index
    %c0_12 = arith.constant 0 : index
    %23 = vector.load %arg20[%c0_11, %22, %c0_12] : memref<4x8x8xbf16, #tpu.memory_space<vmem>>, vector<4x8x8xbf16>
    %c0_13 = arith.constant 0 : index
    %24 = arith.index_cast %21 : i32 to index
    %c0_14 = arith.constant 0 : index
    %25 = vector.load %arg21[%c0_13, %24, %c0_14] : memref<4x8x8xbf16, #tpu.memory_space<vmem>>, vector<4x8x8xbf16>
    "tpu.trace_start"() <{level = 10 : i32, message = "hqd,hkd->hqk"}> : () -> ()
    %cst_15 = arith.constant dense<0.000000e+00> : vector<4x8x8xf32>
    %26 = tpu.matmul %16, %23, %cst_15 {dimension_numbers = #tpu.dot_dimension_numbers<[2], [2], [1], [1], [0, 0, 0, 1, 1, 1], [0], [0]>} : vector<4x8x8xbf16>, vector<4x8x8xbf16>, vector<4x8x8xf32> -> vector<4x8x8xf32>
    "tpu.trace_stop"() : () -> ()
    %cst_16 = arith.constant dense<0xFF800000> : vector<4x8xf32>
    %27 = vector.multi_reduction <maximumf>, %26, %cst_16 [2] : vector<4x8x8xf32> to vector<4x8xf32>
    %28 = vector.shape_cast %27 : vector<4x8xf32> to vector<4x8x1xf32>
    %29 = arith.maximumf %17, %28 : vector<4x8x1xf32>
    %30 = arith.subf %17, %29 : vector<4x8x1xf32>
    %31 = math.exp %30 : vector<4x8x1xf32>
    %32 = vector.broadcast %29 : vector<4x8x1xf32> to vector<4x8x8xf32>
    %33 = arith.subf %26, %32 : vector<4x8x8xf32>
    %34 = math.exp %33 : vector<4x8x8xf32>
    %35 = arith.mulf %31, %18 : vector<4x8x1xf32>
    %cst_17 = arith.constant dense<0.000000e+00> : vector<4x8xf32>
    %36 = vector.multi_reduction <add>, %34, %cst_17 [2] : vector<4x8x8xf32> to vector<4x8xf32>
    %37 = vector.shape_cast %36 : vector<4x8xf32> to vector<4x8x1xf32>
    %38 = arith.addf %35, %37 : vector<4x8x1xf32>
    %39 = vector.broadcast %31 : vector<4x8x1xf32> to vector<4x8x8xf32>
    %40 = arith.mulf %39, %19 : vector<4x8x8xf32>
    %41 = arith.truncf %34 : vector<4x8x8xf32> to vector<4x8x8xbf16>
    "tpu.trace_start"() <{level = 10 : i32, message = "hqk,hkd->hqd"}> : () -> ()
    %cst_18 = arith.constant dense<0.000000e+00> : vector<4x8x8xf32>
    %42 = tpu.matmul %41, %25, %cst_18 {dimension_numbers = #tpu.dot_dimension_numbers<[2], [1], [1], [2], [0, 0, 0, 1, 1, 2], [0], [0]>} : vector<4x8x8xbf16>, vector<4x8x8xbf16>, vector<4x8x8xf32> -> vector<4x8x8xf32>
    "tpu.trace_stop"() : () -> ()
    %43 = arith.addf %40, %42 : vector<4x8x8xf32>
    %c1_i32 = arith.constant 1 : i32
    %44 = tpu.reciprocal %38 {approx = true} : vector<4x8x1xf32> -> vector<4x8x1xf32>
    %45 = vector.broadcast %44 : vector<4x8x1xf32> to vector<4x8x8xf32>
    %46 = arith.mulf %43, %45 : vector<4x8x8xf32>
    %47 = tpu.transpose %46, [1, 0, 2] : vector<4x8x8xf32> -> vector<8x4x8xf32>
    %48 = vector.shape_cast %47 : vector<8x4x8xf32> to vector<8x32xf32>
    %49 = arith.truncf %48 : vector<8x32xf32> to vector<8x32xbf16>
    %c0_19 = arith.constant 0 : index
    %c0_20 = arith.constant 0 : index
    %50 = vector.load %arg9[%c0_19, %c0_20] : memref<32x32xbf16, #tpu.memory_space<vmem>>, vector<32x32xbf16>
    %cst_21 = arith.constant dense<0.000000e+00> : vector<8x32xf32>
    %51 = tpu.matmul %49, %50, %cst_21 {dimension_numbers = #tpu.dot_dimension_numbers<[1], [0], [0], [1], [0, 0, 1, 1], [], []>} : vector<8x32xbf16>, vector<32x32xbf16>, vector<8x32xf32> -> vector<8x32xf32>
    %c0_22 = arith.constant 0 : index
    %c0_23 = arith.constant 0 : index
    %52 = vector.load %arg10[%c0_22, %c0_23] : memref<1x32xf32, #tpu.memory_space<vmem>>, vector<1x32xf32>
    %53 = vector.broadcast %52 : vector<1x32xf32> to vector<8x32xf32>
    %54 = arith.addf %51, %53 : vector<8x32xf32>
    %55 = arith.addf %7, %54 : vector<8x32xf32>
    %c0_24 = arith.constant 0 : index
    %c0_25 = arith.constant 0 : index
    %56 = vector.load %arg11[%c0_24, %c0_25] : memref<1x32xf32, #tpu.memory_space<vmem>>, vector<1x32xf32>
    %c0_26 = arith.constant 0 : index
    %c0_27 = arith.constant 0 : index
    %57 = vector.load %arg12[%c0_26, %c0_27] : memref<1x32xf32, #tpu.memory_space<vmem>>, vector<1x32xf32>
    %cst_28 = arith.constant dense<0.000000e+00> : vector<8xf32>
    %58 = vector.multi_reduction <add>, %55, %cst_28 [1] : vector<8x32xf32> to vector<8xf32>
    %59 = vector.shape_cast %58 : vector<8xf32> to vector<8x1xf32>
    %cst_29 = arith.constant 3.200000e+01 : f32
    %60 = vector.broadcast %cst_29 : f32 to vector<8x1xf32>
    %61 = arith.divf %59, %60 : vector<8x1xf32>
    %62 = vector.broadcast %61 : vector<8x1xf32> to vector<8x32xf32>
    %63 = arith.subf %55, %62 : vector<8x32xf32>
    %64 = arith.mulf %63, %63 : vector<8x32xf32>
    %cst_30 = arith.constant dense<0.000000e+00> : vector<8xf32>
    %65 = vector.multi_reduction <add>, %64, %cst_30 [1] : vector<8x32xf32> to vector<8xf32>
    %66 = vector.shape_cast %65 : vector<8xf32> to vector<8x1xf32>
    %cst_31 = arith.constant 3.200000e+01 : f32
    %67 = vector.broadcast %cst_31 : f32 to vector<8x1xf32>
    %68 = arith.divf %66, %67 : vector<8x1xf32>
    %69 = vector.broadcast %61 : vector<8x1xf32> to vector<8x32xf32>
    %70 = arith.subf %55, %69 : vector<8x32xf32>
    %cst_32 = arith.constant 9.99999974E-6 : f32
    %71 = vector.broadcast %cst_32 : f32 to vector<8x1xf32>
    %72 = arith.addf %68, %71 : vector<8x1xf32>
    %73 = math.rsqrt %72 : vector<8x1xf32>
    %74 = vector.broadcast %73 : vector<8x1xf32> to vector<8x32xf32>
    %75 = arith.mulf %70, %74 : vector<8x32xf32>
    %76 = vector.broadcast %56 : vector<1x32xf32> to vector<8x32xf32>
    %77 = arith.mulf %75, %76 : vector<8x32xf32>
    %78 = vector.broadcast %57 : vector<1x32xf32> to vector<8x32xf32>
    %79 = arith.addf %77, %78 : vector<8x32xf32>
    %80 = arith.truncf %79 : vector<8x32xf32> to vector<8x32xbf16>
    %c0_33 = arith.constant 0 : index
    %c0_34 = arith.constant 0 : index
    %81 = vector.load %arg13[%c0_33, %c0_34] : memref<32x64xbf16, #tpu.memory_space<vmem>>, vector<32x64xbf16>
    %cst_35 = arith.constant dense<0.000000e+00> : vector<8x64xf32>
    %82 = tpu.matmul %80, %81, %cst_35 {dimension_numbers = #tpu.dot_dimension_numbers<[1], [0], [0], [1], [0, 0, 1, 1], [], []>} : vector<8x32xbf16>, vector<32x64xbf16>, vector<8x64xf32> -> vector<8x64xf32>
    %c0_36 = arith.constant 0 : index
    %c0_37 = arith.constant 0 : index
    %83 = vector.load %arg14[%c0_36, %c0_37] : memref<1x64xf32, #tpu.memory_space<vmem>>, vector<1x64xf32>
    %84 = vector.broadcast %83 : vector<1x64xf32> to vector<8x64xf32>
    %85 = arith.addf %82, %84 : vector<8x64xf32>
    %cst_38 = arith.constant 0.000000e+00 : f32
    %86 = vector.broadcast %cst_38 : f32 to vector<8x64xf32>
    %87 = arith.maximumf %85, %86 : vector<8x64xf32>
    %88 = arith.truncf %87 : vector<8x64xf32> to vector<8x64xbf16>
    %c0_39 = arith.constant 0 : index
    %c0_40 = arith.constant 0 : index
    %89 = vector.load %arg15[%c0_39, %c0_40] : memref<64x32xbf16, #tpu.memory_space<vmem>>, vector<64x32xbf16>
    %cst_41 = arith.constant dense<0.000000e+00> : vector<8x32xf32>
    %90 = tpu.matmul %88, %89, %cst_41 {dimension_numbers = #tpu.dot_dimension_numbers<[1], [0], [0], [1], [0, 0, 1, 1], [], []>} : vector<8x64xbf16>, vector<64x32xbf16>, vector<8x32xf32> -> vector<8x32xf32>
    %c0_42 = arith.constant 0 : index
    %c0_43 = arith.constant 0 : index
    %91 = vector.load %arg16[%c0_42, %c0_43] : memref<1x32xf32, #tpu.memory_space<vmem>>, vector<1x32xf32>
    %92 = vector.broadcast %91 : vector<1x32xf32> to vector<8x32xf32>
    %93 = arith.addf %90, %92 : vector<8x32xf32>
    %94 = arith.addf %79, %93 : vector<8x32xf32>
    %c0_44 = arith.constant 0 : index
    %c0_45 = arith.constant 0 : index
    %95 = vector.load %arg17[%c0_44, %c0_45] : memref<1x32xf32, #tpu.memory_space<vmem>>, vector<1x32xf32>
    %c0_46 = arith.constant 0 : index
    %c0_47 = arith.constant 0 : index
    %96 = vector.load %arg18[%c0_46, %c0_47] : memref<1x32xf32, #tpu.memory_space<vmem>>, vector<1x32xf32>
    %cst_48 = arith.constant dense<0.000000e+00> : vector<8xf32>
    %97 = vector.multi_reduction <add>, %94, %cst_48 [1] : vector<8x32xf32> to vector<8xf32>
    %98 = vector.shape_cast %97 : vector<8xf32> to vector<8x1xf32>
    %cst_49 = arith.constant 3.200000e+01 : f32
    %99 = vector.broadcast %cst_49 : f32 to vector<8x1xf32>
    %100 = arith.divf %98, %99 : vector<8x1xf32>
    %101 = vector.broadcast %100 : vector<8x1xf32> to vector<8x32xf32>
    %102 = arith.subf %94, %101 : vector<8x32xf32>
    %103 = arith.mulf %102, %102 : vector<8x32xf32>
    %cst_50 = arith.constant dense<0.000000e+00> : vector<8xf32>
    %104 = vector.multi_reduction <add>, %103, %cst_50 [1] : vector<8x32xf32> to vector<8xf32>
    %105 = vector.shape_cast %104 : vector<8xf32> to vector<8x1xf32>
    %cst_51 = arith.constant 3.200000e+01 : f32
    %106 = vector.broadcast %cst_51 : f32 to vector<8x1xf32>
    %107 = arith.divf %105, %106 : vector<8x1xf32>
    %108 = vector.broadcast %100 : vector<8x1xf32> to vector<8x32xf32>
    %109 = arith.subf %94, %108 : vector<8x32xf32>
    %cst_52 = arith.constant 9.99999974E-6 : f32
    %110 = vector.broadcast %cst_52 : f32 to vector<8x1xf32>
    %111 = arith.addf %107, %110 : vector<8x1xf32>
    %112 = math.rsqrt %111 : vector<8x1xf32>
    %113 = vector.broadcast %112 : vector<8x1xf32> to vector<8x32xf32>
    %114 = arith.mulf %109, %113 : vector<8x32xf32>
    %115 = vector.broadcast %95 : vector<1x32xf32> to vector<8x32xf32>
    %116 = arith.mulf %114, %115 : vector<8x32xf32>
    %117 = vector.broadcast %96 : vector<1x32xf32> to vector<8x32xf32>
    %118 = arith.addf %116, %117 : vector<8x32xf32>
    %c0_53 = arith.constant 0 : index
    %c0_54 = arith.constant 0 : index
    %c0_55 = arith.constant 0 : index
    %119 = vector.load %arg19[%c0_53, %c0_54, %c0_55] : memref<1x8x32xf32, #tpu.memory_space<vmem>>, vector<1x8x32xf32>
    %120 = vector.shape_cast %119 : vector<1x8x32xf32> to vector<8x32xf32>
    %121 = vector.shape_cast %118 : vector<8x32xf32> to vector<1x8x32xf32>
    tpu.vector_store %arg19[%c0_53, %c0_54, %c0_55], %121 {strides = array<i32>} : memref<1x8x32xf32, #tpu.memory_space<vmem>>, vector<1x8x32xf32>,
    return
  }
  func.func @transform_0(%arg0: i32, %arg1: i32) -> (i32, i32, i32) {
    %c0_i32 = arith.constant 0 : i32
    %c0_i32_0 = arith.constant 0 : i32
    %c0_i32_1 = arith.constant 0 : i32
    return %arg0, %c0_i32, %c0_i32_0 : i32, i32, i32
  }
  func.func @transform_1(%arg0: i32, %arg1: i32) -> (i32, i32) {
    %c0_i32 = arith.constant 0 : i32
    %c0_i32_0 = arith.constant 0 : i32
    %c0_i32_1 = arith.constant 0 : i32
    return %c0_i32, %c0_i32_0 : i32, i32
  }
  func.func @transform_2(%arg0: i32, %arg1: i32) -> (i32, i32) {
    %c0_i32 = arith.constant 0 : i32
    %c0_i32_0 = arith.constant 0 : i32
    %c0_i32_1 = arith.constant 0 : i32
    return %c0_i32, %c0_i32_0 : i32, i32
  }
  func.func @transform_3(%arg0: i32, %arg1: i32) -> (i32, i32) {
    %c0_i32 = arith.constant 0 : i32
    %c0_i32_0 = arith.constant 0 : i32
    %c0_i32_1 = arith.constant 0 : i32
    return %c0_i32, %c0_i32_0 : i32, i32
  }
  func.func @transform_4(%arg0: i32, %arg1: i32) -> (i32, i32) {
    %c0_i32 = arith.constant 0 : i32
    %c0_i32_0 = arith.constant 0 : i32
    %c0_i32_1 = arith.constant 0 : i32
    return %c0_i32, %c0_i32_0 : i32, i32
  }
  func.func @transform_5(%arg0: i32, %arg1: i32) -> (i32, i32) {
    %c0_i32 = arith.constant 0 : i32
    %c0_i32_0 = arith.constant 0 : i32
    %c0_i32_1 = arith.constant 0 : i32
    return %c0_i32, %c0_i32_0 : i32, i32
  }
  func.func @transform_6(%arg0: i32, %arg1: i32) -> (i32, i32) {
    %c0_i32 = arith.constant 0 : i32
    %c0_i32_0 = arith.constant 0 : i32
    %c0_i32_1 = arith.constant 0 : i32
    return %c0_i32, %c0_i32_0 : i32, i32
  }
  func.func @transform_7(%arg0: i32, %arg1: i32) -> (i32, i32) {
    %c0_i32 = arith.constant 0 : i32
    %c0_i32_0 = arith.constant 0 : i32
    %c0_i32_1 = arith.constant 0 : i32
    return %c0_i32, %c0_i32_0 : i32, i32
  }
  func.func @transform_8(%arg0: i32, %arg1: i32) -> (i32, i32) {
    %c0_i32 = arith.constant 0 : i32
    %c0_i32_0 = arith.constant 0 : i32
    %c0_i32_1 = arith.constant 0 : i32
    return %c0_i32, %c0_i32_0 : i32, i32
  }
  func.func @transform_9(%arg0: i32, %arg1: i32) -> (i32, i32) {
    %c0_i32 = arith.constant 0 : i32
    %c0_i32_0 = arith.constant 0 : i32
    %c0_i32_1 = arith.constant 0 : i32
    return %c0_i32, %c0_i32_0 : i32, i32
  }
  func.func @transform_10(%arg0: i32, %arg1: i32) -> (i32, i32) {
    %c0_i32 = arith.constant 0 : i32
    %c0_i32_0 = arith.constant 0 : i32
    %c0_i32_1 = arith.constant 0 : i32
    return %c0_i32, %c0_i32_0 : i32, i32
  }
  func.func @transform_11(%arg0: i32, %arg1: i32) -> (i32, i32) {
    %c0_i32 = arith.constant 0 : i32
    %c0_i32_0 = arith.constant 0 : i32
    %c0_i32_1 = arith.constant 0 : i32
    return %c0_i32, %c0_i32_0 : i32, i32
  }
  func.func @transform_12(%arg0: i32, %arg1: i32) -> (i32, i32) {
    %c0_i32 = arith.constant 0 : i32
    %c0_i32_0 = arith.constant 0 : i32
    %c0_i32_1 = arith.constant 0 : i32
    return %c0_i32, %c0_i32_0 : i32, i32
  }
  func.func @transform_13(%arg0: i32, %arg1: i32) -> (i32, i32) {
    %c0_i32 = arith.constant 0 : i32
    %c0_i32_0 = arith.constant 0 : i32
    %c0_i32_1 = arith.constant 0 : i32
    return %c0_i32, %c0_i32_0 : i32, i32
  }
  func.func @transform_14(%arg0: i32, %arg1: i32) -> (i32, i32) {
    %c0_i32 = arith.constant 0 : i32
    %c0_i32_0 = arith.constant 0 : i32
    %c0_i32_1 = arith.constant 0 : i32
    return %c0_i32, %c0_i32_0 : i32, i32
  }
  func.func @transform_15(%arg0: i32, %arg1: i32) -> (i32, i32) {
    %c0_i32 = arith.constant 0 : i32
    %c0_i32_0 = arith.constant 0 : i32
    %c0_i32_1 = arith.constant 0 : i32
    return %c0_i32, %c0_i32_0 : i32, i32
  }
  func.func @transform_16(%arg0: i32, %arg1: i32) -> (i32, i32) {
    %c0_i32 = arith.constant 0 : i32
    %c0_i32_0 = arith.constant 0 : i32
    %c0_i32_1 = arith.constant 0 : i32
    return %c0_i32, %c0_i32_0 : i32, i32
  }
  func.func @transform_17(%arg0: i32, %arg1: i32) -> (i32, i32, i32) {
    %c0_i32 = arith.constant 0 : i32
    %c0_i32_0 = arith.constant 0 : i32
    return %arg0, %arg1, %c0_i32 : i32, i32, i32
  }
}

</mosaic_0001>

<llo_original>
// kernel: tpu_custom_call.1
$region0: #{tpu_custom_call.1}
  #allocation0 [shape = 'u32[]', space=smem, size = 0x4, offset = 0x4, fixed_abs, tag = 'smem constant byte address 0x4 - core index']
  #allocation1 [shape = 'u32[72,128]{1,0:T(1,128)}', space=vmem, size = 0x9000, scoped, tag = 'internal scratch']
  #allocation2 [shape = 'bf16[4,8,8]{2,1,0:T(8,128)(2,1)}', space=vmem, size = 0x2000, scoped, tag = 'scratch operand']
  #allocation3 [shape = 'bf16[4,8,8]{2,1,0:T(8,128)(2,1)}', space=vmem, size = 0x2000, scoped, tag = 'scratch operand']
  %s0 = inlined_call_operand.vmem [shape: f32[2,8,32], index: 0, kind: input, shape index: {}]
  %s1 = inlined_call_operand.vmem [shape: bf16[32,32], index: 1, kind: input, shape index: {}]
  %s2 = inlined_call_operand.vmem [shape: f32[1,32], index: 2, kind: input, shape index: {}]
  %s3 = inlined_call_operand.vmem [shape: bf16[32,32], index: 3, kind: input, shape index: {}]
  %s4 = inlined_call_operand.vmem [shape: f32[1,32], index: 4, kind: input, shape index: {}]
  %s5 = inlined_call_operand.hbm [shape: bf16[32,32], index: 5, kind: input, shape index: {}]
  %s6 = inlined_call_operand.vmem [shape: f32[1,32], index: 6, kind: input, shape index: {}]
  %s7 = inlined_call_operand.hbm [shape: bf16[32,32], index: 7, kind: input, shape index: {}]
  %s8 = inlined_call_operand.vmem [shape: f32[1,32], index: 8, kind: input, shape index: {}]
  %s9 = inlined_call_operand.vmem [shape: f32[1,32], index: 9, kind: input, shape index: {}]
  %s10 = inlined_call_operand.vmem [shape: f32[1,32], index: 10, kind: input, shape index: {}]
  %s11 = inlined_call_operand.hbm [shape: bf16[32,64], index: 11, kind: input, shape index: {}]
  %s12 = inlined_call_operand.vmem [shape: f32[1,64], index: 12, kind: input, shape index: {}]
  %s13 = inlined_call_operand.vmem [shape: bf16[64,32], index: 13, kind: input, shape index: {}]
  %s14 = inlined_call_operand.vmem [shape: f32[1,32], index: 14, kind: input, shape index: {}]
  %s15 = inlined_call_operand.vmem [shape: f32[1,32], index: 15, kind: input, shape index: {}]
  %s16 = inlined_call_operand.vmem [shape: f32[1,32], index: 16, kind: input, shape index: {}]
  %s17 = inlined_call_operand.hbm [shape: f32[2,8,32], index: 17, kind: output, shape index: {}]
  %s18 = sld [smem:[#allocation0]]
  $region117: #{tpu_custom_call.1} parent=0
    _
  %s20 = ssub.s32 1, %s18
  %s21 = scalar_select 0, %s20, %s18
  $region1: #{tpu_custom_call.1} parent=0
    #allocation4 [shape = 'u8[8192]{0}', space=vmem, size = 0x2000, scoped, tag = 'input window, operand 5, single buffered']
    #allocation5 [shape = 's32[2]{0}', space=sflag, size = 0x8, scoped, tag = 'scoped memory for tpu_custom_call.1']
    #allocation6 [shape = 's32[2]{0}', space=sflag, size = 0x8, scoped, tag = 'scoped memory for tpu_custom_call.1']
    #allocation7 [shape = 'u8[8192]{0}', space=vmem, size = 0x2000, scoped, tag = 'input window, operand 7, single buffered']
    #allocation8 [shape = 's32[1]{0}', space=sflag, size = 0x4, scoped, tag = 'scoped memory for tpu_custom_call.1']
    #allocation9 [shape = 'u8[8192]{0}', space=vmem, size = 0x2000, scoped, tag = 'input window, operand 11, single buffered']
    #allocation10 [shape = 'u8[8192]{0}', space=vmem, size = 0x2000, scoped, tag = 'output window, operand 0']
    %22 = vsyncpa [#allocation5], 0
    %23 = vsyncpa [#allocation8], 0
    %24 = vsyncpa [#allocation6], 0
    %s25 = scalar_lea.sflag [#allocation6], 1
    %26 = vsyncpa %s25, 0
    loop: start=0, step=1, limit=4
    $region2: #{tpu_custom_call.1} parent=1 // loop_pre_header
      _
    $region3: #{tpu_custom_call.1} parent=1 // loop_header
      %s28 = sphi 0, %s32
      %p29 = scmp.ge.s32.totalorder %s28, 4
      %s35 = sphi 0, %s47
      %s36 = sphi 0, %s43
      %s37 = sphi 0, %s35
      %s38 = sphi 0, %s36
      %s39 = sphi 0, %s37
      %s40 = sphi 0, %s38
      %s50 = sphi 0, %s52
      %s53 = sphi 0, %s50
      %s54 = sphi 0, %s53
      %s70 = sphi 0, %s54
      %s74 = sphi 0, %s74
      %s76 = sphi 0, %s74
      %s77 = sphi 0, %s76
      %s91 = sphi 0, %s77
      %s95 = sphi 0, %s95
      %s97 = sphi 0, %s95
      %s98 = sphi 0, %s97
      %s112 = sphi 0, %s98
      %s116 = sphi 0, %s116
      %s118 = sphi 0, %s116
      %s119 = sphi 0, %s118
      %s133 = sphi 0, %s119
      %s137 = sphi 0, %s137
      %s139 = sphi 0, %s137
      %s140 = sphi 0, %s139
      %s154 = sphi 0, %s140
      %s158 = sphi 0, %s158
      %s160 = sphi 0, %s158
      %s161 = sphi 0, %s160
      %s175 = sphi 0, %s161
      %s179 = sphi 0, %s179
      %s181 = sphi 0, %s179
      %s182 = sphi 0, %s181
      %s196 = sphi 0, %s182
      %s200 = sphi 0, %s200
      %s202 = sphi 0, %s200
      %s203 = sphi 0, %s202
      %s217 = sphi 0, %s203
      %s221 = sphi 0, %s221
      %s223 = sphi 0, %s221
      %s224 = sphi 0, %s223
      %s238 = sphi 0, %s224
      %s242 = sphi 0, %s242
      %s244 = sphi 0, %s242
      %s245 = sphi 0, %s244
      %s259 = sphi 0, %s245
      %s263 = sphi 0, %s263
      %s265 = sphi 0, %s263
      %s266 = sphi 0, %s265
      %s280 = sphi 0, %s266
      %s284 = sphi 0, %s284
      %s286 = sphi 0, %s284
      %s287 = sphi 0, %s286
      %s301 = sphi 0, %s287
      %s305 = sphi 0, %s305
      %s307 = sphi 0, %s305
      %s308 = sphi 0, %s307
      %s322 = sphi 0, %s308
      %s326 = sphi 0, %s326
      %s328 = sphi 0, %s326
      %s329 = sphi 0, %s328
      %s343 = sphi 0, %s329
      %s347 = sphi 0, %s347
      %s349 = sphi 0, %s347
      %s350 = sphi 0, %s349
      %s364 = sphi 0, %s350
      %s368 = sphi 0, %s368
      %s370 = sphi 0, %s368
      %s371 = sphi 0, %s370
      %s385 = sphi 0, %s371
      %s389 = sphi 0, %s389
      %s391 = sphi 0, %s389
      %s392 = sphi 0, %s391
      %s406 = sphi 0, %s392
      %s414 = sphi 0, %s416
      %s417 = sphi 0, %s414
      %s418 = sphi 0, %s417
      %s434 = sphi 0, %s418
    $region4: #{tpu_custom_call.1} parent=1 // loop_header_branch
      %31 = sbr.rel (%p29) target = $region8
    $region5: #{tpu_custom_call.1} parent=1 // loop_body
      %s33 = ssub.s32 %s28, 1
      %s34 = ssub.s32 %s28, 2
      %s41 = sadd.s32 1, %s36
      %p42 = scmp.ge.s32.totalorder %s41, 1
      %s43 = scalar_select %p42, 0, %s41
      %s44 = sadd.s32 1, %s35
      %s45 = scalar_select %p42, %s44, %s35
      %p46 = scmp.ge.s32.totalorder %s45, 2
      %s47 = scalar_select %p46, 0, %s45
      %s48 = ssub.s32 %s35, %s47
      %p49 = scmp.eq.s32.totalorder %s48, 0
      %s51 = sadd.s32 %s50, 1
      %s52 = scalar_select %p49, %s50, %s51
      %p55 = pneg %p49
      %p56 = scmp.eq.s32.totalorder %s28, 1
      %p57 = por %p55, %p56
      %p58 = scmp.ne.s32.totalorder %s50, %s53
      %p59 = scmp.eq.s32.totalorder %s28, 0
      %p60 = por %p58, %p59
      %p61 = scmp.ne.s32.totalorder %s50, %s53
      %p62 = scmp.eq.s32.totalorder %s33, 1
      %p63 = por %p61, %p62
      %p64 = scmp.ne.s32.totalorder %s53, %s54
      %p65 = scmp.eq.s32.totalorder %s33, 0
      %p66 = por %p64, %p65
      %p67 = scmp.ne.s32.totalorder %s53, %s54
      %p68 = scmp.eq.s32.totalorder %s34, 1
      %p69 = por %p67, %p68
      %p71 = scmp.ne.s32.totalorder %s54, %s70
      %p72 = scmp.eq.s32.totalorder %s34, 0
      %p73 = por %p71, %p72
      %s75 = sadd.s32 %s74, 1
      %p78 = scmp.eq.s32.totalorder %s28, 1
      %p79 = scmp.ne.s32.totalorder %s74, %s76
      %p80 = scmp.eq.s32.totalorder %s28, 0
      %p81 = por %p79, %p80
      %p82 = scmp.ne.s32.totalorder %s74, %s76
      %p83 = scmp.eq.s32.totalorder %s33, 1
      %p84 = por %p82, %p83
      %p85 = scmp.ne.s32.totalorder %s76, %s77
      %p86 = scmp.eq.s32.totalorder %s33, 0
      %p87 = por %p85, %p86
      %p88 = scmp.ne.s32.totalorder %s76, %s77
      %p89 = scmp.eq.s32.totalorder %s34, 1
      %p90 = por %p88, %p89
      %p92 = scmp.ne.s32.totalorder %s77, %s91
      %p93 = scmp.eq.s32.totalorder %s34, 0
      %p94 = por %p92, %p93
      %s96 = sadd.s32 %s95, 1
      %p99 = scmp.eq.s32.totalorder %s28, 1
      %p100 = scmp.ne.s32.totalorder %s95, %s97
      %p101 = scmp.eq.s32.totalorder %s28, 0
      %p102 = por %p100, %p101
      %p103 = scmp.ne.s32.totalorder %s95, %s97
      %p104 = scmp.eq.s32.totalorder %s33, 1
      %p105 = por %p103, %p104
      %p106 = scmp.ne.s32.totalorder %s97, %s98
      %p107 = scmp.eq.s32.totalorder %s33, 0
      %p108 = por %p106, %p107
      %p109 = scmp.ne.s32.totalorder %s97, %s98
      %p110 = scmp.eq.s32.totalorder %s34, 1
      %p111 = por %p109, %p110
      %p113 = scmp.ne.s32.totalorder %s98, %s112
      %p114 = scmp.eq.s32.totalorder %s34, 0
      %p115 = por %p113, %p114
      %s117 = sadd.s32 %s116, 1
      %p120 = scmp.eq.s32.totalorder %s28, 1
      %p121 = scmp.ne.s32.totalorder %s116, %s118
      %p122 = scmp.eq.s32.totalorder %s28, 0
      %p123 = por %p121, %p122
      %p124 = scmp.ne.s32.totalorder %s116, %s118
      %p125 = scmp.eq.s32.totalorder %s33, 1
      %p126 = por %p124, %p125
      %p127 = scmp.ne.s32.totalorder %s118, %s119
      %p128 = scmp.eq.s32.totalorder %s33, 0
      %p129 = por %p127, %p128
      %p130 = scmp.ne.s32.totalorder %s118, %s119
      %p131 = scmp.eq.s32.totalorder %s34, 1
      %p132 = por %p130, %p131
      %p134 = scmp.ne.s32.totalorder %s119, %s133
      %p135 = scmp.eq.s32.totalorder %s34, 0
      %p136 = por %p134, %p135
      %s138 = sadd.s32 %s137, 1
      %p141 = scmp.eq.s32.totalorder %s28, 1
      %p142 = scmp.ne.s32.totalorder %s137, %s139
      %p143 = scmp.eq.s32.totalorder %s28, 0
      %p144 = por %p142, %p143
      %p145 = scmp.ne.s32.totalorder %s137, %s139
      %p146 = scmp.eq.s32.totalorder %s33, 1
      %p147 = por %p145, %p146
      %p148 = scmp.ne.s32.totalorder %s139, %s140
      %p149 = scmp.eq.s32.totalorder %s33, 0
      %p150 = por %p148, %p149
      %p151 = scmp.ne.s32.totalorder %s139, %s140
      %p152 = scmp.eq.s32.totalorder %s34, 1
      %p153 = por %p151, %p152
      %p155 = scmp.ne.s32.totalorder %s140, %s154
      %p156 = scmp.eq.s32.totalorder %s34, 0
      %p157 = por %p155, %p156
      %s159 = sadd.s32 %s158, 1
      %p162 = scmp.eq.s32.totalorder %s28, 1
      %p163 = scmp.ne.s32.totalorder %s158, %s160
      %p164 = scmp.eq.s32.totalorder %s28, 0
      %p165 = por %p163, %p164
      %p166 = scmp.ne.s32.totalorder %s158, %s160
      %p167 = scmp.eq.s32.totalorder %s33, 1
      %p168 = por %p166, %p167
      %p169 = scmp.ne.s32.totalorder %s160, %s161
      %p170 = scmp.eq.s32.totalorder %s33, 0
      %p171 = por %p169, %p170
      %p172 = scmp.ne.s32.totalorder %s160, %s161
      %p173 = scmp.eq.s32.totalorder %s34, 1
      %p174 = por %p172, %p173
      %p176 = scmp.ne.s32.totalorder %s161, %s175
      %p177 = scmp.eq.s32.totalorder %s34, 0
      %p178 = por %p176, %p177
      %s180 = sadd.s32 %s179, 1
      %p183 = scmp.eq.s32.totalorder %s28, 1
      %p184 = scmp.ne.s32.totalorder %s179, %s181
      %p185 = scmp.eq.s32.totalorder %s28, 0
      %p186 = por %p184, %p185
      %p187 = scmp.ne.s32.totalorder %s179, %s181
      %p188 = scmp.eq.s32.totalorder %s33, 1
      %p189 = por %p187, %p188
      %p190 = scmp.ne.s32.totalorder %s181, %s182
      %p191 = scmp.eq.s32.totalorder %s33, 0
      %p192 = por %p190, %p191
      %p193 = scmp.ne.s32.totalorder %s181, %s182
      %p194 = scmp.eq.s32.totalorder %s34, 1
      %p195 = por %p193, %p194
      %p197 = scmp.ne.s32.totalorder %s182, %s196
      %p198 = scmp.eq.s32.totalorder %s34, 0
      %p199 = por %p197, %p198
      %s201 = sadd.s32 %s200, 1
      %p204 = scmp.eq.s32.totalorder %s28, 1
      %p205 = scmp.ne.s32.totalorder %s200, %s202
      %p206 = scmp.eq.s32.totalorder %s28, 0
      %p207 = por %p205, %p206
      %p208 = scmp.ne.s32.totalorder %s200, %s202
      %p209 = scmp.eq.s32.totalorder %s33, 1
      %p210 = por %p208, %p209
      %p211 = scmp.ne.s32.totalorder %s202, %s203
      %p212 = scmp.eq.s32.totalorder %s33, 0
      %p213 = por %p211, %p212
      %p214 = scmp.ne.s32.totalorder %s202, %s203
      %p215 = scmp.eq.s32.totalorder %s34, 1
      %p216 = por %p214, %p215
      %p218 = scmp.ne.s32.totalorder %s203, %s217
      %p219 = scmp.eq.s32.totalorder %s34, 0
      %p220 = por %p218, %p219
      %s222 = sadd.s32 %s221, 1
      %p225 = scmp.eq.s32.totalorder %s28, 1
      %p226 = scmp.ne.s32.totalorder %s221, %s223
      %p227 = scmp.eq.s32.totalorder %s28, 0
      %p228 = por %p226, %p227
      %p229 = scmp.ne.s32.totalorder %s221, %s223
      %p230 = scmp.eq.s32.totalorder %s33, 1
      %p231 = por %p229, %p230
      %p232 = scmp.ne.s32.totalorder %s223, %s224
      %p233 = scmp.eq.s32.totalorder %s33, 0
      %p234 = por %p232, %p233
      %p235 = scmp.ne.s32.totalorder %s223, %s224
      %p236 = scmp.eq.s32.totalorder %s34, 1
      %p237 = por %p235, %p236
      %p239 = scmp.ne.s32.totalorder %s224, %s238
      %p240 = scmp.eq.s32.totalorder %s34, 0
      %p241 = por %p239, %p240
      %s243 = sadd.s32 %s242, 1
      %p246 = scmp.eq.s32.totalorder %s28, 1
      %p247 = scmp.ne.s32.totalorder %s242, %s244
      %p248 = scmp.eq.s32.totalorder %s28, 0
      %p249 = por %p247, %p248
      %p250 = scmp.ne.s32.totalorder %s242, %s244
      %p251 = scmp.eq.s32.totalorder %s33, 1
      %p252 = por %p250, %p251
      %p253 = scmp.ne.s32.totalorder %s244, %s245
      %p254 = scmp.eq.s32.totalorder %s33, 0
      %p255 = por %p253, %p254
      %p256 = scmp.ne.s32.totalorder %s244, %s245
      %p257 = scmp.eq.s32.totalorder %s34, 1
      %p258 = por %p256, %p257
      %p260 = scmp.ne.s32.totalorder %s245, %s259
      %p261 = scmp.eq.s32.totalorder %s34, 0
      %p262 = por %p260, %p261
      %s264 = sadd.s32 %s263, 1
      %p267 = scmp.eq.s32.totalorder %s28, 1
      %p268 = scmp.ne.s32.totalorder %s263, %s265
      %p269 = scmp.eq.s32.totalorder %s28, 0
      %p270 = por %p268, %p269
      %p271 = scmp.ne.s32.totalorder %s263, %s265
      %p272 = scmp.eq.s32.totalorder %s33, 1
      %p273 = por %p271, %p272
      %p274 = scmp.ne.s32.totalorder %s265, %s266
      %p275 = scmp.eq.s32.totalorder %s33, 0
      %p276 = por %p274, %p275
      %p277 = scmp.ne.s32.totalorder %s265, %s266
      %p278 = scmp.eq.s32.totalorder %s34, 1
      %p279 = por %p277, %p278
      %p281 = scmp.ne.s32.totalorder %s266, %s280
      %p282 = scmp.eq.s32.totalorder %s34, 0
      %p283 = por %p281, %p282
      %s285 = sadd.s32 %s284, 1
      %p288 = scmp.eq.s32.totalorder %s28, 1
      %p289 = scmp.ne.s32.totalorder %s284, %s286
      %p290 = scmp.eq.s32.totalorder %s28, 0
      %p291 = por %p289, %p290
      %p292 = scmp.ne.s32.totalorder %s284, %s286
      %p293 = scmp.eq.s32.totalorder %s33, 1
      %p294 = por %p292, %p293
      %p295 = scmp.ne.s32.totalorder %s286, %s287
      %p296 = scmp.eq.s32.totalorder %s33, 0
      %p297 = por %p295, %p296
      %p298 = scmp.ne.s32.totalorder %s286, %s287
      %p299 = scmp.eq.s32.totalorder %s34, 1
      %p300 = por %p298, %p299
      %p302 = scmp.ne.s32.totalorder %s287, %s301
      %p303 = scmp.eq.s32.totalorder %s34, 0
      %p304 = por %p302, %p303
      %s306 = sadd.s32 %s305, 1
      %p309 = scmp.eq.s32.totalorder %s28, 1
      %p310 = scmp.ne.s32.totalorder %s305, %s307
      %p311 = scmp.eq.s32.totalorder %s28, 0
      %p312 = por %p310, %p311
      %p313 = scmp.ne.s32.totalorder %s305, %s307
      %p314 = scmp.eq.s32.totalorder %s33, 1
      %p315 = por %p313, %p314
      %p316 = scmp.ne.s32.totalorder %s307, %s308
      %p317 = scmp.eq.s32.totalorder %s33, 0
      %p318 = por %p316, %p317
      %p319 = scmp.ne.s32.totalorder %s307, %s308
      %p320 = scmp.eq.s32.totalorder %s34, 1
      %p321 = por %p319, %p320
      %p323 = scmp.ne.s32.totalorder %s308, %s322
      %p324 = scmp.eq.s32.totalorder %s34, 0
      %p325 = por %p323, %p324
      %s327 = sadd.s32 %s326, 1
      %p330 = scmp.eq.s32.totalorder %s28, 1
      %p331 = scmp.ne.s32.totalorder %s326, %s328
      %p332 = scmp.eq.s32.totalorder %s28, 0
      %p333 = por %p331, %p332
      %p334 = scmp.ne.s32.totalorder %s326, %s328
      %p335 = scmp.eq.s32.totalorder %s33, 1
      %p336 = por %p334, %p335
      %p337 = scmp.ne.s32.totalorder %s328, %s329
      %p338 = scmp.eq.s32.totalorder %s33, 0
      %p339 = por %p337, %p338
      %p340 = scmp.ne.s32.totalorder %s328, %s329
      %p341 = scmp.eq.s32.totalorder %s34, 1
      %p342 = por %p340, %p341
      %p344 = scmp.ne.s32.totalorder %s329, %s343
      %p345 = scmp.eq.s32.totalorder %s34, 0
      %p346 = por %p344, %p345
      %s348 = sadd.s32 %s347, 1
      %p351 = scmp.eq.s32.totalorder %s28, 1
      %p352 = scmp.ne.s32.totalorder %s347, %s349
      %p353 = scmp.eq.s32.totalorder %s28, 0
      %p354 = por %p352, %p353
      %p355 = scmp.ne.s32.totalorder %s347, %s349
      %p356 = scmp.eq.s32.totalorder %s33, 1
      %p357 = por %p355, %p356
      %p358 = scmp.ne.s32.totalorder %s349, %s350
      %p359 = scmp.eq.s32.totalorder %s33, 0
      %p360 = por %p358, %p359
      %p361 = scmp.ne.s32.totalorder %s349, %s350
      %p362 = scmp.eq.s32.totalorder %s34, 1
      %p363 = por %p361, %p362
      %p365 = scmp.ne.s32.totalorder %s350, %s364
      %p366 = scmp.eq.s32.totalorder %s34, 0
      %p367 = por %p365, %p366
      %s369 = sadd.s32 %s368, 1
      %p372 = scmp.eq.s32.totalorder %s28, 1
      %p373 = scmp.ne.s32.totalorder %s368, %s370
      %p374 = scmp.eq.s32.totalorder %s28, 0
      %p375 = por %p373, %p374
      %p376 = scmp.ne.s32.totalorder %s368, %s370
      %p377 = scmp.eq.s32.totalorder %s33, 1
      %p378 = por %p376, %p377
      %p379 = scmp.ne.s32.totalorder %s370, %s371
      %p380 = scmp.eq.s32.totalorder %s33, 0
      %p381 = por %p379, %p380
      %p382 = scmp.ne.s32.totalorder %s370, %s371
      %p383 = scmp.eq.s32.totalorder %s34, 1
      %p384 = por %p382, %p383
      %p386 = scmp.ne.s32.totalorder %s371, %s385
      %p387 = scmp.eq.s32.totalorder %s34, 0
      %p388 = por %p386, %p387
      %s390 = sadd.s32 %s389, 1
      %p393 = scmp.eq.s32.totalorder %s28, 1
      %p394 = scmp.ne.s32.totalorder %s389, %s391
      %p395 = scmp.eq.s32.totalorder %s28, 0
      %p396 = por %p394, %p395
      %p397 = scmp.ne.s32.totalorder %s389, %s391
      %p398 = scmp.eq.s32.totalorder %s33, 1
      %p399 = por %p397, %p398
      %p400 = scmp.ne.s32.totalorder %s391, %s392
      %p401 = scmp.eq.s32.totalorder %s33, 0
      %p402 = por %p400, %p401
      %p403 = scmp.ne.s32.totalorder %s391, %s392
      %p404 = scmp.eq.s32.totalorder %s34, 1
      %p405 = por %p403, %p404
      %p407 = scmp.ne.s32.totalorder %s392, %s406
      %p408 = scmp.eq.s32.totalorder %s34, 0
      %p409 = por %p407, %p408
      %s410 = ssub.s32 %s35, %s47
      %s411 = ssub.s32 %s36, %s43
      %s412 = sor.u32 %s410, %s411
      %p413 = scmp.eq.s32.totalorder %s412, 0
      %s415 = sadd.s32 %s414, 1
      %s416 = scalar_select %p413, %s414, %s415
      %p419 = pneg %p413
      %p420 = scmp.eq.s32.totalorder %s28, 1
      %p421 = por %p419, %p420
      %p422 = scmp.ne.s32.totalorder %s414, %s417
      %p423 = scmp.eq.s32.totalorder %s28, 0
      %p424 = por %p422, %p423
      %p425 = scmp.ne.s32.totalorder %s414, %s417
      %p426 = scmp.eq.s32.totalorder %s33, 1
      %p427 = por %p425, %p426
      %p428 = scmp.ne.s32.totalorder %s417, %s418
      %p429 = scmp.eq.s32.totalorder %s33, 0
      %p430 = por %p428, %p429
      %p431 = scmp.ne.s32.totalorder %s417, %s418
      %p432 = scmp.eq.s32.totalorder %s34, 1
      %p433 = por %p431, %p432
      %p435 = scmp.ne.s32.totalorder %s418, %s434
      %p436 = scmp.eq.s32.totalorder %s34, 0
      %p437 = por %p435, %p436
      %p438 = scmp.le.s32.totalorder 1, %s28
      %p439 = scmp.lt.s32.totalorder %s28, 3
      %p440 = pnand %p438, %p439
      %p441 = pneg %p440
      // Predicated region
      $region9: #{tpu_custom_call.1} parent=5 // pred_check
        _
      $region10: #{tpu_custom_call.1} parent=5 // pred_check_branch
        %443 = sbr.rel (%p440) target = $region12
      $region11: #{tpu_custom_call.1} parent=5 // pred_region
        %s444 = ssub.s32 %s28, 1
        // Predicated region
        $region13: #{tpu_custom_call.1} parent=11 // pred_check
          %p445 = pneg %p87
        $region14: #{tpu_custom_call.1} parent=11 // pred_check_branch
          %447 = sbr.rel (%p445) target = $region16
        $region15: #{tpu_custom_call.1} parent=11 // pred_region
          _
        $region16: #{tpu_custom_call.1} parent=11 // pred_fallthru
          _
        // Predicated region
        $region17: #{tpu_custom_call.1} parent=11 // pred_check
          %p448 = pneg %p108
        $region18: #{tpu_custom_call.1} parent=11 // pred_check_branch
          %450 = sbr.rel (%p448) target = $region20
        $region19: #{tpu_custom_call.1} parent=11 // pred_region
          _
        $region20: #{tpu_custom_call.1} parent=11 // pred_fallthru
          _
        // Predicated region
        $region21: #{tpu_custom_call.1} parent=11 // pred_check
          %p451 = pneg %p129
        $region22: #{tpu_custom_call.1} parent=11 // pred_check_branch
          %453 = sbr.rel (%p451) target = $region24
        $region23: #{tpu_custom_call.1} parent=11 // pred_region
          _
        $region24: #{tpu_custom_call.1} parent=11 // pred_fallthru
          _
        // Predicated region
        $region25: #{tpu_custom_call.1} parent=11 // pred_check
          %p454 = pneg %p150
        $region26: #{tpu_custom_call.1} parent=11 // pred_check_branch
          %456 = sbr.rel (%p454) target = $region28
        $region27: #{tpu_custom_call.1} parent=11 // pred_region
          _
        $region28: #{tpu_custom_call.1} parent=11 // pred_fallthru
          _
        // Predicated region
        $region29: #{tpu_custom_call.1} parent=11 // pred_check
          %p457 = pneg %p171
        $region30: #{tpu_custom_call.1} parent=11 // pred_check_branch
          %459 = sbr.rel (%p457) target = $region32
        $region31: #{tpu_custom_call.1} parent=11 // pred_region
          %461 = vsyncadd [#allocation5], 0
          %s462 = sshll.u32 %s5, 4
          %s463 = int_to_ptr.hbm [resolvable:$true] %s462
          %s464 = sshll.u32 [#allocation4], 4
          %s465 = int_to_ptr.vmem [resolvable:$true] %s464
          %470 = dma.hbm_to_vmem [thread:$0]  %s463, 256, %s465, [#allocation5], 64, 64, 4
        $region32: #{tpu_custom_call.1} parent=11 // pred_fallthru
          _
        // Predicated region
        $region33: #{tpu_custom_call.1} parent=11 // pred_check
          %p471 = pneg %p192
        $region34: #{tpu_custom_call.1} parent=11 // pred_check_branch
          %473 = sbr.rel (%p471) target = $region36
        $region35: #{tpu_custom_call.1} parent=11 // pred_region
          _
        $region36: #{tpu_custom_call.1} parent=11 // pred_fallthru
          _
        // Predicated region
        $region37: #{tpu_custom_call.1} parent=11 // pred_check
          %p474 = pneg %p213
        $region38: #{tpu_custom_call.1} parent=11 // pred_check_branch
          %476 = sbr.rel (%p474) target = $region40
        $region39: #{tpu_custom_call.1} parent=11 // pred_region
          %478 = vsyncadd [#allocation8], 0
          %s479 = sshll.u32 %s7, 4
          %s480 = int_to_ptr.hbm [resolvable:$true] %s479
          %s481 = sshll.u32 [#allocation7], 4
          %s482 = int_to_ptr.vmem [resolvable:$true] %s481
          %487 = dma.hbm_to_vmem [thread:$0]  %s480, 256, %s482, [#allocation8], 64, 64, 4
        $region40: #{tpu_custom_call.1} parent=11 // pred_fallthru
          _
        // Predicated region
        $region41: #{tpu_custom_call.1} parent=11 // pred_check
          %p488 = pneg %p234
        $region42: #{tpu_custom_call.1} parent=11 // pred_check_branch
          %490 = sbr.rel (%p488) target = $region44
        $region43: #{tpu_custom_call.1} parent=11 // pred_region
          _
        $region44: #{tpu_custom_call.1} parent=11 // pred_fallthru
          _
        // Predicated region
        $region45: #{tpu_custom_call.1} parent=11 // pred_check
          %p491 = pneg %p255
        $region46: #{tpu_custom_call.1} parent=11 // pred_check_branch
          %493 = sbr.rel (%p491) target = $region48
        $region47: #{tpu_custom_call.1} parent=11 // pred_region
          _
        $region48: #{tpu_custom_call.1} parent=11 // pred_fallthru
          _
        // Predicated region
        $region49: #{tpu_custom_call.1} parent=11 // pred_check
          %p494 = pneg %p276
        $region50: #{tpu_custom_call.1} parent=11 // pred_check_branch
          %496 = sbr.rel (%p494) target = $region52
        $region51: #{tpu_custom_call.1} parent=11 // pred_region
          _
        $region52: #{tpu_custom_call.1} parent=11 // pred_fallthru
          _
        // Predicated region
        $region53: #{tpu_custom_call.1} parent=11 // pred_check
          %p497 = pneg %p297
        $region54: #{tpu_custom_call.1} parent=11 // pred_check_branch
          %499 = sbr.rel (%p497) target = $region56
        $region55: #{tpu_custom_call.1} parent=11 // pred_region
          %501 = vsyncadd [#allocation8], 0
          %s502 = sshll.u32 %s11, 4
          %s503 = int_to_ptr.hbm [resolvable:$true] %s502
          %s504 = sshll.u32 [#allocation9], 4
          %s505 = int_to_ptr.vmem [resolvable:$true] %s504
          %510 = dma.hbm_to_vmem [thread:$0]  %s503, 256, %s505, [#allocation8], 64, 64, 4
        $region56: #{tpu_custom_call.1} parent=11 // pred_fallthru
          _
        // Predicated region
        $region57: #{tpu_custom_call.1} parent=11 // pred_check
          %p511 = pneg %p318
        $region58: #{tpu_custom_call.1} parent=11 // pred_check_branch
          %513 = sbr.rel (%p511) target = $region60
        $region59: #{tpu_custom_call.1} parent=11 // pred_region
          _
        $region60: #{tpu_custom_call.1} parent=11 // pred_fallthru
          _
        // Predicated region
        $region61: #{tpu_custom_call.1} parent=11 // pred_check
          %p514 = pneg %p339
        $region62: #{tpu_custom_call.1} parent=11 // pred_check_branch
          %516 = sbr.rel (%p514) target = $region64
        $region63: #{tpu_custom_call.1} parent=11 // pred_region
          _
        $region64: #{tpu_custom_call.1} parent=11 // pred_fallthru
          _
        // Predicated region
        $region65: #{tpu_custom_call.1} parent=11 // pred_check
          %p517 = pneg %p360
        $region66: #{tpu_custom_call.1} parent=11 // pred_check_branch
          %519 = sbr.rel (%p517) target = $region68
        $region67: #{tpu_custom_call.1} parent=11 // pred_region
          _
        $region68: #{tpu_custom_call.1} parent=11 // pred_fallthru
          _
        // Predicated region
        $region69: #{tpu_custom_call.1} parent=11 // pred_check
          %p520 = pneg %p381
        $region70: #{tpu_custom_call.1} parent=11 // pred_check_branch
          %522 = sbr.rel (%p520) target = $region72
        $region71: #{tpu_custom_call.1} parent=11 // pred_region
          _
        $region72: #{tpu_custom_call.1} parent=11 // pred_fallthru
          _
        // Predicated region
        $region73: #{tpu_custom_call.1} parent=11 // pred_check
          %p523 = pneg %p402
        $region74: #{tpu_custom_call.1} parent=11 // pred_check_branch
          %525 = sbr.rel (%p523) target = $region76
        $region75: #{tpu_custom_call.1} parent=11 // pred_region
          _
        $region76: #{tpu_custom_call.1} parent=11 // pred_fallthru
          _
      $region12: #{tpu_custom_call.1} parent=5 // pred_fallthru
        _
      %p526 = scmp.lt.s32.totalorder %s28, 2
      // Predicated region
      $region77: #{tpu_custom_call.1} parent=5 // pred_check
        %p527 = pneg %p526
      $region78: #{tpu_custom_call.1} parent=5 // pred_check_branch
        %529 = sbr.rel (%p527) target = $region80
      $region79: #{tpu_custom_call.1} parent=5 // pred_region
        // Predicated region
        $region81: #{tpu_custom_call.1} parent=79 // pred_check
          %p530 = pneg %p60
        $region82: #{tpu_custom_call.1} parent=79 // pred_check_branch
          %532 = sbr.rel (%p530) target = $region84
        $region83: #{tpu_custom_call.1} parent=79 // pred_region
          %p533 = scmp.lt.s32.totalorder %s35, 1
          %s534 = scalar_select %p533, %s35, 1
          %s535 = smul.addr %s534, 8
          %s536 = scalar_lea.vmem %s0, %s535
        $region84: #{tpu_custom_call.1} parent=79 // pred_fallthru
          _
      $region80: #{tpu_custom_call.1} parent=5 // pred_fallthru
        _
      %p537 = scmp.le.s32.totalorder 1, %s28
      %p538 = scmp.lt.s32.totalorder %s28, 3
      %p539 = pnand %p537, %p538
      %p540 = pneg %p539
      // Predicated region
      $region85: #{tpu_custom_call.1} parent=5 // pred_check
        _
      $region86: #{tpu_custom_call.1} parent=5 // pred_check_branch
        %542 = sbr.rel (%p539) target = $region88
      $region87: #{tpu_custom_call.1} parent=5 // pred_region
        %s543 = ssub.s32 %s28, 1
        // Predicated region
        $region89: #{tpu_custom_call.1} parent=87 // pred_check
          %p544 = pneg %p171
        $region90: #{tpu_custom_call.1} parent=87 // pred_check_branch
          %546 = sbr.rel (%p544) target = $region92
        $region91: #{tpu_custom_call.1} parent=87 // pred_region
          %548 = dma.done [#allocation5], 256
        $region92: #{tpu_custom_call.1} parent=87 // pred_fallthru
          _
        // Predicated region
        $region93: #{tpu_custom_call.1} parent=87 // pred_check
          %p549 = pneg %p213
        $region94: #{tpu_custom_call.1} parent=87 // pred_check_branch
          %551 = sbr.rel (%p549) target = $region96
        $region95: #{tpu_custom_call.1} parent=87 // pred_region
          %553 = dma.done [#allocation8], 256
        $region96: #{tpu_custom_call.1} parent=87 // pred_fallthru
          _
        // Predicated region
        $region97: #{tpu_custom_call.1} parent=87 // pred_check
          %p554 = pneg %p297
        $region98: #{tpu_custom_call.1} parent=87 // pred_check_branch
          %556 = sbr.rel (%p554) target = $region100
        $region99: #{tpu_custom_call.1} parent=87 // pred_region
          %558 = dma.done [#allocation8], 256
        $region100: #{tpu_custom_call.1} parent=87 // pred_fallthru
          _
        %p559 = scmp.lt.s32.totalorder %s37, 1
        %s560 = scalar_select %p559, %s37, 1
        %s561 = smul.addr %s560, 8
        %s562 = scalar_lea.vmem %s0, %s561
        %p563 = pneg %p66
        %p564 = pneg %p63
        %p565 = pneg %p87
        %p566 = pneg %p84
        %p567 = pneg %p108
        %p568 = pneg %p105
        %p569 = pneg %p129
        %p570 = pneg %p126
        %p571 = pneg %p150
        %p572 = pneg %p147
        %p573 = pneg %p171
        %p574 = pneg %p168
        %p575 = pneg %p192
        %p576 = pneg %p189
        %p577 = pneg %p213
        %p578 = pneg %p210
        %p579 = pneg %p234
        %p580 = pneg %p231
        %p581 = pneg %p255
        %p582 = pneg %p252
        %p583 = pneg %p276
        %p584 = pneg %p273
        %p585 = pneg %p297
        %p586 = pneg %p294
        %p587 = pneg %p318
        %p588 = pneg %p315
        %p589 = pneg %p339
        %p590 = pneg %p336
        %p591 = pneg %p360
        %p592 = pneg %p357
        %p593 = pneg %p381
        %p594 = pneg %p378
        %p595 = pneg %p402
        %p596 = pneg %p399
        %p597 = pneg %p430
        %p598 = pneg %p427
        %s599 = sand.u32 %s417, 1
        %s600 = scalar_lea.sflag [#allocation6], %s599
        %s601 = sand.u32 %s417, 1
        %s602 = smul.addr %s601, 8
        %s603 = scalar_lea.vmem [#allocation10], %s602
        %p604 = scmp.lt.s32.totalorder %s37, 1
        %s605 = scalar_select %p604, %s37, 1
        %s606 = smul.addr %s605, 8
        %s607 = scalar_lea.vmem %s0, %s606
        %p609 = scmp.eq.s32.totalorder %s38, 0
        // Predicated region
        $region101: #{tpu_custom_call.1} parent=87 // pred_check
          %p610 = pneg %p609
        $region102: #{tpu_custom_call.1} parent=87 // pred_check_branch
          %612 = sbr.rel (%p610) target = $region104
        $region103: #{tpu_custom_call.1} parent=87 // pred_region
          %v613 = vld [vmem:[%s607] sm:$0xff]
          %v614 = vpack.c.bf16 %v613, %v613
          %v615 = vld [vmem:[%s3] sm:$0xf]
          %v616 = vld [vmem:[%s3 + $0x4] sm:$0xf]
          %v617 = vld [vmem:[%s3 + $0x8] sm:$0xf]
          %v618 = vld [vmem:[%s3 + $0xc] sm:$0xf]
          %v619 = vld [vmem:[%s4] sm:$0x1]
          %v621 = vperm.slane %v619, 0
          %v627 = vunpack.c.l.b16 %v615
          %v628 = vunpack.c.l.b16 %v616
          %v629 = vunpack.c.l.b16 %v617
          %v630 = vunpack.c.l.b16 %v618
          %v631 = vpack.c.b16 %v628, %v627
          %v632 = vpack.c.b16 %v630, %v629
          %vm635 = vcmask 261120
          %v637 = vsel %vm635, %v614, 0
          %639 = vmatpush.bf16.msra.mxu0 0
          %640 = vmatpush.bf16.msra.mxu0 0
          %641 = vmatpush.bf16.msra.mxu0 0
          %642 = vmatpush.bf16.msra.mxu0 0
          %643 = vmatpush.bf16.msra.mxu0 0
          %644 = vmatpush.bf16.msra.mxu0 0
          %645 = vmatpush.bf16.msra.mxu0 %v632
          %646 = vmatpush.bf16.msra.mxu0 %v631
          %647 = vmatmul.bf16.gmra.mxu0 %v637
          %v648 = vpop.f32.mrf.mxu0
          %v649 = vadd.f32 %v621, %v648
          %v650 = vpop.f32.mrf.mxu0
          %651 = vdwg.mxu0
          %v652 = vld [vmem:[#allocation4] sm:$0xf]
          %v653 = vld [vmem:[#allocation4 + $0x4] sm:$0xf]
          %v654 = vld [vmem:[#allocation4 + $0x8] sm:$0xf]
          %v655 = vld [vmem:[#allocation4 + $0xc] sm:$0xf]
          %v656 = vld [vmem:[%s6] sm:$0x1]
          %v658 = vperm.slane %v656, 0
          %v664 = vunpack.c.l.b16 %v652
          %v665 = vunpack.c.l.b16 %v653
          %v666 = vunpack.c.l.b16 %v654
          %v667 = vunpack.c.l.b16 %v655
          %v668 = vpack.c.b16 %v665, %v664
          %v669 = vpack.c.b16 %v667, %v666
          %672 = vmatpush.bf16.msra.mxu0 0
          %673 = vmatpush.bf16.msra.mxu0 0
          %674 = vmatpush.bf16.msra.mxu0 0
          %675 = vmatpush.bf16.msra.mxu0 0
          %676 = vmatpush.bf16.msra.mxu0 0
          %677 = vmatpush.bf16.msra.mxu0 0
          %678 = vmatpush.bf16.msra.mxu0 %v669
          %679 = vmatpush.bf16.msra.mxu0 %v668
          %680 = vmatmul.bf16.gmra.mxu0 %v637
          %v681 = vpop.f32.mrf.mxu0
          %v682 = vadd.f32 %v658, %v681
          %v683 = vpop.f32.mrf.mxu0
          %684 = vdwg.mxu0
          %686 = vrot.lane.b32.xlu0 %v649, 120
          %v687 = vpop.permute.xlu0 %686
          %689 = vrot.lane.b32.xlu0 %v649, 112
          %v690 = vpop.permute.xlu0 %689
          %692 = vrot.lane.b32.xlu0 %v649, 104
          %v693 = vpop.permute.xlu0 %692
          %v695 = vrot.slane %v690, 4
          %vm696 = vcmask 1047556
          %v697 = vsel %vm696, %v695, %v649
          %v698 = vrot.slane %v649, 4
          %v699 = vsel %vm696, %v690, %v698
          %v701 = vunpack.c.l.s4 1983009808
          %v702 = vunpack.c.0.s8 %v701
          %v703 = vperm.slane %v697, %v702
          %v705 = vunpack.c.l.s4 1983009808
          %v706 = vunpack.c.0.s8 %v705
          %v707 = vperm.slane %v699, %v706
          %v708 = vrot.slane %v693, 4
          %v709 = vsel %vm696, %v708, %v687
          %v710 = vrot.slane %v687, 4
          %v711 = vsel %vm696, %v693, %v710
          %v713 = vunpack.c.l.s4 1983009808
          %v714 = vunpack.c.0.s8 %v713
          %v715 = vperm.slane %v709, %v714
          %v717 = vunpack.c.l.s4 1983009808
          %v718 = vunpack.c.0.s8 %v717
          %v719 = vperm.slane %v711, %v718
          %v720 = vrot.slane %v715, 4
          %v721 = vsel %vm696, %v720, %v703
          %v722 = vrot.slane %v703, 4
          %v723 = vsel %vm696, %v715, %v722
          %v725 = vunpack.c.l.s4 1934713408
          %v726 = vunpack.c.0.s8 %v725
          %v727 = vperm.slane %v721, %v726
          %v729 = vunpack.c.l.s4 1934713408
          %v730 = vunpack.c.0.s8 %v729
          %v731 = vperm.slane %v723, %v730
          %v732 = vrot.slane %v719, 4
          %v733 = vsel %vm696, %v732, %v707
          %v734 = vrot.slane %v707, 4
          %v735 = vsel %vm696, %v719, %v734
          %v737 = vunpack.c.l.s4 1934713408
          %v738 = vunpack.c.0.s8 %v737
          %v739 = vperm.slane %v733, %v738
          %v741 = vunpack.c.l.s4 1934713408
          %v742 = vunpack.c.0.s8 %v741
          %v743 = vperm.slane %v735, %v742
          %v744 = vrot.slane %v727, 4
          %v745 = vsel %vm696, 0.0, %v744
          %v746 = vrot.slane %v731, 4
          %v747 = vsel %vm696, 0.0, %v746
          %v748 = vrot.slane %v739, 4
          %v749 = vsel %vm696, 0.0, %v748
          %v750 = vrot.slane %v743, 4
          %v751 = vsel %vm696, 0.0, %v750
          %v752 = vsel %vm696, %v746, %v727
          %v754 = vunpack.c.l.s4 1983009808
          %v755 = vunpack.c.0.s8 %v754
          %v756 = vperm.slane %v752, %v755
          %v757 = vrot.slane %v747, 4
          %v758 = vsel %vm696, %v757, %v745
          %v760 = vunpack.c.l.s4 1983009808
          %v761 = vunpack.c.0.s8 %v760
          %v762 = vperm.slane %v758, %v761
          %v763 = vsel %vm696, %v750, %v739
          %v765 = vunpack.c.l.s4 1983009808
          %v766 = vunpack.c.0.s8 %v765
          %v767 = vperm.slane %v763, %v766
          %v768 = vrot.slane %v751, 4
          %v769 = vsel %vm696, %v768, %v749
          %v771 = vunpack.c.l.s4 1983009808
          %v772 = vunpack.c.0.s8 %v771
          %v773 = vperm.slane %v769, %v772
          %v774 = vrot.slane %v762, 4
          %v775 = vsel %vm696, %v774, %v756
          %v776 = vrot.slane %v756, 4
          %v777 = vsel %vm696, %v762, %v776
          %v779 = vunpack.c.l.s4 1934713408
          %v780 = vunpack.c.0.s8 %v779
          %v781 = vperm.slane %v775, %v780
          %v783 = vunpack.c.l.s4 1934713408
          %v784 = vunpack.c.0.s8 %v783
          %v785 = vperm.slane %v777, %v784
          %v786 = vrot.slane %v773, 4
          %v787 = vsel %vm696, %v786, %v767
          %v788 = vrot.slane %v767, 4
          %v789 = vsel %vm696, %v773, %v788
          %v791 = vunpack.c.l.s4 1934713408
          %v792 = vunpack.c.0.s8 %v791
          %v793 = vperm.slane %v787, %v792
          %v795 = vunpack.c.l.s4 1934713408
          %v796 = vunpack.c.0.s8 %v795
          %v797 = vperm.slane %v789, %v796
          %v798 = vrot.slane %v793, 4
          %v799 = vsel %vm696, %v798, %v781
          %v800 = vrot.slane %v781, 4
          %v801 = vsel %vm696, %v793, %v800
          %v802 = vrot.slane %v797, 4
          %v803 = vsel %vm696, %v802, %v785
          %v804 = vrot.slane %v785, 4
          %v805 = vsel %vm696, %v797, %v804
          %v806 = vpack.c.bf16 %v799, %v799
          %v807 = vpack.c.bf16 %v801, %v801
          %v808 = vpack.c.bf16 %v803, %v803
          %v809 = vpack.c.bf16 %v805, %v805
          %vm810 = vcmask 60416
          %811 = vst.msk [vmem:[#allocation2] sm:$0xf] %vm810, %v806
          %812 = vst.msk [vmem:[#allocation2 + $0x4] sm:$0xf] %vm810, %v807
          %813 = vst.msk [vmem:[#allocation2 + $0x8] sm:$0xf] %vm810, %v808
          %814 = vst.msk [vmem:[#allocation2 + $0xc] sm:$0xf] %vm810, %v809
          %816 = vrot.lane.b32.xlu0 %v682, 120
          %v817 = vpop.permute.xlu0 %816
          %819 = vrot.lane.b32.xlu0 %v682, 112
          %v820 = vpop.permute.xlu0 %819
          %822 = vrot.lane.b32.xlu0 %v682, 104
          %v823 = vpop.permute.xlu0 %822
          %v825 = vrot.slane %v820, 4
          %v826 = vsel %vm696, %v825, %v682
          %v827 = vrot.slane %v682, 4
          %v828 = vsel %vm696, %v820, %v827
          %v830 = vunpack.c.l.s4 1983009808
          %v831 = vunpack.c.0.s8 %v830
          %v832 = vperm.slane %v826, %v831
          %v834 = vunpack.c.l.s4 1983009808
          %v835 = vunpack.c.0.s8 %v834
          %v836 = vperm.slane %v828, %v835
          %v837 = vrot.slane %v823, 4
          %v838 = vsel %vm696, %v837, %v817
          %v839 = vrot.slane %v817, 4
          %v840 = vsel %vm696, %v823, %v839
          %v842 = vunpack.c.l.s4 1983009808
          %v843 = vunpack.c.0.s8 %v842
          %v844 = vperm.slane %v838, %v843
          %v846 = vunpack.c.l.s4 1983009808
          %v847 = vunpack.c.0.s8 %v846
          %v848 = vperm.slane %v840, %v847
          %v849 = vrot.slane %v844, 4
          %v850 = vsel %vm696, %v849, %v832
          %v851 = vrot.slane %v832, 4
          %v852 = vsel %vm696, %v844, %v851
          %v854 = vunpack.c.l.s4 1934713408
          %v855 = vunpack.c.0.s8 %v854
          %v856 = vperm.slane %v850, %v855
          %v858 = vunpack.c.l.s4 1934713408
          %v859 = vunpack.c.0.s8 %v858
          %v860 = vperm.slane %v852, %v859
          %v861 = vrot.slane %v848, 4
          %v862 = vsel %vm696, %v861, %v836
          %v863 = vrot.slane %v836, 4
          %v864 = vsel %vm696, %v848, %v863
          %v866 = vunpack.c.l.s4 1934713408
          %v867 = vunpack.c.0.s8 %v866
          %v868 = vperm.slane %v862, %v867
          %v870 = vunpack.c.l.s4 1934713408
          %v871 = vunpack.c.0.s8 %v870
          %v872 = vperm.slane %v864, %v871
          %v873 = vrot.slane %v856, 4
          %v874 = vsel %vm696, 0.0, %v873
          %v875 = vrot.slane %v860, 4
          %v876 = vsel %vm696, 0.0, %v875
          %v877 = vrot.slane %v868, 4
          %v878 = vsel %vm696, 0.0, %v877
          %v879 = vrot.slane %v872, 4
          %v880 = vsel %vm696, 0.0, %v879
          %v881 = vsel %vm696, %v875, %v856
          %v883 = vunpack.c.l.s4 1983009808
          %v884 = vunpack.c.0.s8 %v883
          %v885 = vperm.slane %v881, %v884
          %v886 = vrot.slane %v876, 4
          %v887 = vsel %vm696, %v886, %v874
          %v889 = vunpack.c.l.s4 1983009808
          %v890 = vunpack.c.0.s8 %v889
          %v891 = vperm.slane %v887, %v890
          %v892 = vsel %vm696, %v879, %v868
          %v894 = vunpack.c.l.s4 1983009808
          %v895 = vunpack.c.0.s8 %v894
          %v896 = vperm.slane %v892, %v895
          %v897 = vrot.slane %v880, 4
          %v898 = vsel %vm696, %v897, %v878
          %v900 = vunpack.c.l.s4 1983009808
          %v901 = vunpack.c.0.s8 %v900
          %v902 = vperm.slane %v898, %v901
          %v903 = vrot.slane %v891, 4
          %v904 = vsel %vm696, %v903, %v885
          %v905 = vrot.slane %v885, 4
          %v906 = vsel %vm696, %v891, %v905
          %v908 = vunpack.c.l.s4 1934713408
          %v909 = vunpack.c.0.s8 %v908
          %v910 = vperm.slane %v904, %v909
          %v912 = vunpack.c.l.s4 1934713408
          %v913 = vunpack.c.0.s8 %v912
          %v914 = vperm.slane %v906, %v913
          %v915 = vrot.slane %v902, 4
          %v916 = vsel %vm696, %v915, %v896
          %v917 = vrot.slane %v896, 4
          %v918 = vsel %vm696, %v902, %v917
          %v920 = vunpack.c.l.s4 1934713408
          %v921 = vunpack.c.0.s8 %v920
          %v922 = vperm.slane %v916, %v921
          %v924 = vunpack.c.l.s4 1934713408
          %v925 = vunpack.c.0.s8 %v924
          %v926 = vperm.slane %v918, %v925
          %v927 = vrot.slane %v922, 4
          %v928 = vsel %vm696, %v927, %v910
          %v929 = vrot.slane %v910, 4
          %v930 = vsel %vm696, %v922, %v929
          %v931 = vrot.slane %v926, 4
          %v932 = vsel %vm696, %v931, %v914
          %v933 = vrot.slane %v914, 4
          %v934 = vsel %vm696, %v926, %v933
          %v935 = vpack.c.bf16 %v928, %v928
          %v936 = vpack.c.bf16 %v930, %v930
          %v937 = vpack.c.bf16 %v932, %v932
          %v938 = vpack.c.bf16 %v934, %v934
          %939 = vst.msk [vmem:[#allocation3] sm:$0xf] %vm810, %v935
          %940 = vst.msk [vmem:[#allocation3 + $0x4] sm:$0xf] %vm810, %v936
          %941 = vst.msk [vmem:[#allocation3 + $0x8] sm:$0xf] %vm810, %v937
          %942 = vst.msk [vmem:[#allocation3 + $0xc] sm:$0xf] %vm810, %v938
        $region104: #{tpu_custom_call.1} parent=87 // pred_fallthru
          _
        %s943 = smul.u32 %s38, 8
        %s944 = scalar_lea.vmem %s607, %s943
        %v945 = vld [vmem:[%s944] sm:$0xff]
        %v946 = vpack.c.bf16 %v945, %v945
        %v947 = vld [vmem:[%s1] sm:$0xf]
        %v948 = vld [vmem:[%s1 + $0x4] sm:$0xf]
        %v949 = vld [vmem:[%s1 + $0x8] sm:$0xf]
        %v950 = vld [vmem:[%s1 + $0xc] sm:$0xf]
        %v951 = vld [vmem:[%s2] sm:$0x1]
        %v953 = vperm.slane %v951, 0
        %v959 = vunpack.c.l.b16 %v947
        %v960 = vunpack.c.l.b16 %v948
        %v961 = vunpack.c.l.b16 %v949
        %v962 = vunpack.c.l.b16 %v950
        %v963 = vpack.c.b16 %v960, %v959
        %v964 = vpack.c.b16 %v962, %v961
        %vm967 = vcmask 261120
        %v969 = vsel %vm967, %v946, 0
        %971 = vmatpush.bf16.msra.mxu0 0
        %972 = vmatpush.bf16.msra.mxu0 0
        %973 = vmatpush.bf16.msra.mxu0 0
        %974 = vmatpush.bf16.msra.mxu0 0
        %975 = vmatpush.bf16.msra.mxu0 0
        %976 = vmatpush.bf16.msra.mxu0 0
        %977 = vmatpush.bf16.msra.mxu0 %v964
        %978 = vmatpush.bf16.msra.mxu0 %v963
        %979 = vmatmul.bf16.gmra.mxu0 %v969
        %v980 = vpop.f32.mrf.mxu0
        %v981 = vadd.f32 %v953, %v980
        %v982 = vpop.f32.mrf.mxu0
        %983 = vdwg.mxu0
        %985 = vrot.lane.b32.xlu0 %v981, 120
        %v986 = vpop.permute.xlu0 %985
        %988 = vrot.lane.b32.xlu0 %v981, 112
        %v989 = vpop.permute.xlu0 %988
        %991 = vrot.lane.b32.xlu0 %v981, 104
        %v992 = vpop.permute.xlu0 %991
        %v994 = vrot.slane %v989, 4
        %vm995 = vcmask 1047556
        %v996 = vsel %vm995, %v994, %v981
        %v997 = vrot.slane %v981, 4
        %v998 = vsel %vm995, %v989, %v997
        %v1000 = vunpack.c.l.s4 1983009808
        %v1001 = vunpack.c.0.s8 %v1000
        %v1002 = vperm.slane %v996, %v1001
        %v1004 = vunpack.c.l.s4 1983009808
        %v1005 = vunpack.c.0.s8 %v1004
        %v1006 = vperm.slane %v998, %v1005
        %v1007 = vrot.slane %v992, 4
        %v1008 = vsel %vm995, %v1007, %v986
        %v1009 = vrot.slane %v986, 4
        %v1010 = vsel %vm995, %v992, %v1009
        %v1012 = vunpack.c.l.s4 1983009808
        %v1013 = vunpack.c.0.s8 %v1012
        %v1014 = vperm.slane %v1008, %v1013
        %v1016 = vunpack.c.l.s4 1983009808
        %v1017 = vunpack.c.0.s8 %v1016
        %v1018 = vperm.slane %v1010, %v1017
        %v1019 = vrot.slane %v1014, 4
        %v1020 = vsel %vm995, %v1019, %v1002
        %v1021 = vrot.slane %v1002, 4
        %v1022 = vsel %vm995, %v1014, %v1021
        %v1024 = vunpack.c.l.s4 1934713408
        %v1025 = vunpack.c.0.s8 %v1024
        %v1026 = vperm.slane %v1020, %v1025
        %v1028 = vunpack.c.l.s4 1934713408
        %v1029 = vunpack.c.0.s8 %v1028
        %v1030 = vperm.slane %v1022, %v1029
        %v1031 = vrot.slane %v1018, 4
        %v1032 = vsel %vm995, %v1031, %v1006
        %v1033 = vrot.slane %v1006, 4
        %v1034 = vsel %vm995, %v1018, %v1033
        %v1036 = vunpack.c.l.s4 1934713408
        %v1037 = vunpack.c.0.s8 %v1036
        %v1038 = vperm.slane %v1032, %v1037
        %v1040 = vunpack.c.l.s4 1934713408
        %v1041 = vunpack.c.0.s8 %v1040
        %v1042 = vperm.slane %v1034, %v1041
        %v1043 = vrot.slane %v1026, 4
        %v1044 = vsel %vm995, 0.0, %v1043
        %v1045 = vrot.slane %v1030, 4
        %v1046 = vsel %vm995, 0.0, %v1045
        %v1047 = vrot.slane %v1038, 4
        %v1048 = vsel %vm995, 0.0, %v1047
        %v1049 = vrot.slane %v1042, 4
        %v1050 = vsel %vm995, 0.0, %v1049
        %v1051 = vsel %vm995, %v1045, %v1026
        %v1053 = vunpack.c.l.s4 1983009808
        %v1054 = vunpack.c.0.s8 %v1053
        %v1055 = vperm.slane %v1051, %v1054
        %v1056 = vrot.slane %v1046, 4
        %v1057 = vsel %vm995, %v1056, %v1044
        %v1059 = vunpack.c.l.s4 1983009808
        %v1060 = vunpack.c.0.s8 %v1059
        %v1061 = vperm.slane %v1057, %v1060
        %v1062 = vsel %vm995, %v1049, %v1038
        %v1064 = vunpack.c.l.s4 1983009808
        %v1065 = vunpack.c.0.s8 %v1064
        %v1066 = vperm.slane %v1062, %v1065
        %v1067 = vrot.slane %v1050, 4
        %v1068 = vsel %vm995, %v1067, %v1048
        %v1070 = vunpack.c.l.s4 1983009808
        %v1071 = vunpack.c.0.s8 %v1070
        %v1072 = vperm.slane %v1068, %v1071
        %v1073 = vrot.slane %v1061, 4
        %v1074 = vsel %vm995, %v1073, %v1055
        %v1075 = vrot.slane %v1055, 4
        %v1076 = vsel %vm995, %v1061, %v1075
        %v1078 = vunpack.c.l.s4 1934713408
        %v1079 = vunpack.c.0.s8 %v1078
        %v1080 = vperm.slane %v1074, %v1079
        %v1082 = vunpack.c.l.s4 1934713408
        %v1083 = vunpack.c.0.s8 %v1082
        %v1084 = vperm.slane %v1076, %v1083
        %v1085 = vrot.slane %v1072, 4
        %v1086 = vsel %vm995, %v1085, %v1066
        %v1087 = vrot.slane %v1066, 4
        %v1088 = vsel %vm995, %v1072, %v1087
        %v1090 = vunpack.c.l.s4 1934713408
        %v1091 = vunpack.c.0.s8 %v1090
        %v1092 = vperm.slane %v1086, %v1091
        %v1094 = vunpack.c.l.s4 1934713408
        %v1095 = vunpack.c.0.s8 %v1094
        %v1096 = vperm.slane %v1088, %v1095
        %v1097 = vrot.slane %v1092, 4
        %v1098 = vsel %vm995, %v1097, %v1080
        %v1099 = vrot.slane %v1080, 4
        %v1100 = vsel %vm995, %v1092, %v1099
        %v1101 = vrot.slane %v1096, 4
        %v1102 = vsel %vm995, %v1101, %v1084
        %v1103 = vrot.slane %v1084, 4
        %v1104 = vsel %vm995, %v1096, %v1103
        %v1105 = vpack.c.bf16 %v1098, %v1098
        %v1106 = vpack.c.bf16 %v1100, %v1100
        %v1107 = vpack.c.bf16 %v1102, %v1102
        %v1108 = vpack.c.bf16 %v1104, %v1104
        %v1109 = vld [vmem:[#allocation2] sm:$0xf]
        %v1110 = vld [vmem:[#allocation2 + $0x4] sm:$0xf]
        %v1111 = vld [vmem:[#allocation2 + $0x8] sm:$0xf]
        %v1112 = vld [vmem:[#allocation2 + $0xc] sm:$0xf]
        %v1113 = vld [vmem:[#allocation3] sm:$0xf]
        %v1114 = vld [vmem:[#allocation3 + $0x4] sm:$0xf]
        %v1115 = vld [vmem:[#allocation3 + $0x8] sm:$0xf]
        %v1116 = vld [vmem:[#allocation3 + $0xc] sm:$0xf]
        %vm1117 = vcmask 64512
        %v1119 = vsel %vm1117, %v1105, 0
        %v1122 = vsel %vm1117, %v1109, 0
        %1124 = vmatpush.bf16.xpose.msra.mxu0 0
        %1125 = vmatpush.bf16.xpose.msra.mxu0 0
        %1126 = vmatpush.bf16.xpose.msra.mxu0 0
        %1127 = vmatpush.bf16.xpose.msra.mxu0 0
        %1128 = vmatpush.bf16.xpose.msra.mxu0 0
        %1129 = vmatpush.bf16.xpose.msra.mxu0 0
        %1130 = vmatpush.bf16.xpose.msra.mxu0 0
        %1131 = vmatpush.bf16.xpose.msra.mxu0 %v1122
        %1132 = vmatmul.bf16.gmra.mxu0 %v1119
        %v1133 = vpop.f32.mrf.mxu0
        %v1134 = vadd.f32 0.0, %v1133
        %v1135 = vpop.f32.mrf.mxu0
        %1136 = vdwg.mxu0
        %v1138 = vsel %vm1117, %v1106, 0
        %v1141 = vsel %vm1117, %v1110, 0
        %1143 = vmatpush.bf16.xpose.msra.mxu0 0
        %1144 = vmatpush.bf16.xpose.msra.mxu0 0
        %1145 = vmatpush.bf16.xpose.msra.mxu0 0
        %1146 = vmatpush.bf16.xpose.msra.mxu0 0
        %1147 = vmatpush.bf16.xpose.msra.mxu0 0
        %1148 = vmatpush.bf16.xpose.msra.mxu0 0
        %1149 = vmatpush.bf16.xpose.msra.mxu0 0
        %1150 = vmatpush.bf16.xpose.msra.mxu0 %v1141
        %1151 = vmatmul.bf16.gmra.mxu0 %v1138
        %v1152 = vpop.f32.mrf.mxu0
        %v1153 = vadd.f32 0.0, %v1152
        %v1154 = vpop.f32.mrf.mxu0
        %1155 = vdwg.mxu0
        %v1157 = vsel %vm1117, %v1107, 0
        %v1160 = vsel %vm1117, %v1111, 0
        %1162 = vmatpush.bf16.xpose.msra.mxu0 0
        %1163 = vmatpush.bf16.xpose.msra.mxu0 0
        %1164 = vmatpush.bf16.xpose.msra.mxu0 0
        %1165 = vmatpush.bf16.xpose.msra.mxu0 0
        %1166 = vmatpush.bf16.xpose.msra.mxu0 0
        %1167 = vmatpush.bf16.xpose.msra.mxu0 0
        %1168 = vmatpush.bf16.xpose.msra.mxu0 0
        %1169 = vmatpush.bf16.xpose.msra.mxu0 %v1160
        %1170 = vmatmul.bf16.gmra.mxu0 %v1157
        %v1171 = vpop.f32.mrf.mxu0
        %v1172 = vadd.f32 0.0, %v1171
        %v1173 = vpop.f32.mrf.mxu0
        %1174 = vdwg.mxu0
        %v1176 = vsel %vm1117, %v1108, 0
        %v1179 = vsel %vm1117, %v1112, 0
        %1181 = vmatpush.bf16.xpose.msra.mxu0 0
        %1182 = vmatpush.bf16.xpose.msra.mxu0 0
        %1183 = vmatpush.bf16.xpose.msra.mxu0 0
        %1184 = vmatpush.bf16.xpose.msra.mxu0 0
        %1185 = vmatpush.bf16.xpose.msra.mxu0 0
        %1186 = vmatpush.bf16.xpose.msra.mxu0 0
        %1187 = vmatpush.bf16.xpose.msra.mxu0 0
        %1188 = vmatpush.bf16.xpose.msra.mxu0 %v1179
        %1189 = vmatmul.bf16.gmra.mxu0 %v1176
        %v1190 = vpop.f32.mrf.mxu0
        %v1191 = vadd.f32 0.0, %v1190
        %v1192 = vpop.f32.mrf.mxu0
        %1193 = vdwg.mxu0
        %v1194 = vsel %vm1117, %v1134, -inf
        %1195 = vmax.xlane.f32.xlu0 %v1194
        %v1196 = vpop.xlane.xlu0 %1195
        %v1197 = vsel %vm1117, %v1153, -inf
        %1198 = vmax.xlane.f32.xlu0 %v1197
        %v1199 = vpop.xlane.xlu0 %1198
        %v1200 = vsel %vm1117, %v1172, -inf
        %1201 = vmax.xlane.f32.xlu0 %v1200
        %v1202 = vpop.xlane.xlu0 %1201
        %v1203 = vsel %vm1117, %v1191, -inf
        %1204 = vmax.xlane.f32.xlu0 %v1203
        %v1205 = vpop.xlane.xlu0 %1204
        %v1206 = vsub.f32 -inf, %v1196
        %v1207 = vsub.f32 -inf, %v1199
        %v1208 = vsub.f32 -inf, %v1202
        %v1209 = vsub.f32 -inf, %v1205
        %v1210 = vmul.f32 %v1206, 1.442695
        %v1211 = vpow.pop %v1210
        %v1212 = vmul.f32 %v1207, 1.442695
        %v1213 = vpow.pop %v1212
        %v1214 = vmul.f32 %v1208, 1.442695
        %v1215 = vpow.pop %v1214
        %v1216 = vmul.f32 %v1209, 1.442695
        %v1217 = vpow.pop %v1216
        %v1218 = vsub.f32 %v1134, %v1196
        %v1219 = vsub.f32 %v1153, %v1199
        %v1220 = vsub.f32 %v1172, %v1202
        %v1221 = vsub.f32 %v1191, %v1205
        %v1222 = vmul.f32 %v1218, 1.442695
        %v1223 = vpow.pop %v1222
        %v1224 = vmul.f32 %v1219, 1.442695
        %v1225 = vpow.pop %v1224
        %v1226 = vmul.f32 %v1220, 1.442695
        %v1227 = vpow.pop %v1226
        %v1228 = vmul.f32 %v1221, 1.442695
        %v1229 = vpow.pop %v1228
        %v1230 = vmul.f32 %v1211, 0.0
        %v1231 = vmul.f32 %v1213, 0.0
        %v1232 = vmul.f32 %v1215, 0.0
        %v1233 = vmul.f32 %v1217, 0.0
        %v1234 = vsel %vm1117, %v1223, 0.0
        %1235 = vadd.xlane.f32.xlu0 %v1234
        %v1236 = vpop.xlane.xlu0 %1235
        %v1237 = vsel %vm1117, %v1225, 0.0
        %1238 = vadd.xlane.f32.xlu0 %v1237
        %v1239 = vpop.xlane.xlu0 %1238
        %v1240 = vsel %vm1117, %v1227, 0.0
        %1241 = vadd.xlane.f32.xlu0 %v1240
        %v1242 = vpop.xlane.xlu0 %1241
        %v1243 = vsel %vm1117, %v1229, 0.0
        %1244 = vadd.xlane.f32.xlu0 %v1243
        %v1245 = vpop.xlane.xlu0 %1244
        %v1246 = vadd.f32 %v1230, %v1236
        %v1247 = vadd.f32 %v1231, %v1239
        %v1248 = vadd.f32 %v1232, %v1242
        %v1249 = vadd.f32 %v1233, %v1245
        %v1250 = vpack.c.bf16 %v1223, %v1223
        %v1251 = vpack.c.bf16 %v1225, %v1225
        %v1252 = vpack.c.bf16 %v1227, %v1227
        %v1253 = vpack.c.bf16 %v1229, %v1229
        %v1255 = vsel %vm1117, %v1250, 0
        %vm1257 = vcmask 1043456
        %v1259 = vsel %vm1257, %v1113, 0
        %1261 = vmatpush.bf16.msra.mxu0 0
        %1262 = vmatpush.bf16.msra.mxu0 0
        %1263 = vmatpush.bf16.msra.mxu0 0
        %1264 = vmatpush.bf16.msra.mxu0 0
        %1265 = vmatpush.bf16.msra.mxu0 0
        %1266 = vmatpush.bf16.msra.mxu0 0
        %1267 = vmatpush.bf16.msra.mxu0 0
        %1268 = vmatpush.bf16.msra.mxu0 %v1259
        %1269 = vmatmul.bf16.gmra.mxu0 %v1255
        %v1270 = vpop.f32.mrf.mxu0
        %v1271 = vadd.f32 0.0, %v1270
        %v1272 = vpop.f32.mrf.mxu0
        %1273 = vdwg.mxu0
        %v1275 = vsel %vm1117, %v1251, 0
        %v1278 = vsel %vm1257, %v1114, 0
        %1280 = vmatpush.bf16.msra.mxu0 0
        %1281 = vmatpush.bf16.msra.mxu0 0
        %1282 = vmatpush.bf16.msra.mxu0 0
        %1283 = vmatpush.bf16.msra.mxu0 0
        %1284 = vmatpush.bf16.msra.mxu0 0
        %1285 = vmatpush.bf16.msra.mxu0 0
        %1286 = vmatpush.bf16.msra.mxu0 0
        %1287 = vmatpush.bf16.msra.mxu0 %v1278
        %1288 = vmatmul.bf16.gmra.mxu0 %v1275
        %v1289 = vpop.f32.mrf.mxu0
        %v1290 = vadd.f32 0.0, %v1289
        %v1291 = vpop.f32.mrf.mxu0
        %1292 = vdwg.mxu0
        %v1294 = vsel %vm1117, %v1252, 0
        %v1297 = vsel %vm1257, %v1115, 0
        %1299 = vmatpush.bf16.msra.mxu0 0
        %1300 = vmatpush.bf16.msra.mxu0 0
        %1301 = vmatpush.bf16.msra.mxu0 0
        %1302 = vmatpush.bf16.msra.mxu0 0
        %1303 = vmatpush.bf16.msra.mxu0 0
        %1304 = vmatpush.bf16.msra.mxu0 0
        %1305 = vmatpush.bf16.msra.mxu0 0
        %1306 = vmatpush.bf16.msra.mxu0 %v1297
        %1307 = vmatmul.bf16.gmra.mxu0 %v1294
        %v1308 = vpop.f32.mrf.mxu0
        %v1309 = vadd.f32 0.0, %v1308
        %v1310 = vpop.f32.mrf.mxu0
        %1311 = vdwg.mxu0
        %v1313 = vsel %vm1117, %v1253, 0
        %v1316 = vsel %vm1257, %v1116, 0
        %1318 = vmatpush.bf16.msra.mxu0 0
        %1319 = vmatpush.bf16.msra.mxu0 0
        %1320 = vmatpush.bf16.msra.mxu0 0
        %1321 = vmatpush.bf16.msra.mxu0 0
        %1322 = vmatpush.bf16.msra.mxu0 0
        %1323 = vmatpush.bf16.msra.mxu0 0
        %1324 = vmatpush.bf16.msra.mxu0 0
        %1325 = vmatpush.bf16.msra.mxu0 %v1316
        %1326 = vmatmul.bf16.gmra.mxu0 %v1313
        %v1327 = vpop.f32.mrf.mxu0
        %v1328 = vadd.f32 0.0, %v1327
        %v1329 = vpop.f32.mrf.mxu0
        %1330 = vdwg.mxu0
        %v1331 = vadd.f32 %v1230, %v1271
        %v1332 = vadd.f32 %v1231, %v1290
        %v1333 = vadd.f32 %v1232, %v1309
        %v1334 = vadd.f32 %v1233, %v1328
        %v1335 = vrcp.pop %v1246
        %v1336 = vrcp.pop %v1247
        %v1337 = vrcp.pop %v1248
        %v1338 = vrcp.pop %v1249
        %v1339 = vmul.f32 %v1331, %v1335
        %v1340 = vmul.f32 %v1332, %v1336
        %v1341 = vmul.f32 %v1333, %v1337
        %v1342 = vmul.f32 %v1334, %v1338
        %v1343 = vrot.slane %v1341, 4
        %v1344 = vsel %vm995, %v1343, %v1339
        %v1345 = vrot.slane %v1339, 4
        %v1346 = vsel %vm995, %v1341, %v1345
        %v1348 = vunpack.c.l.s4 1983009808
        %v1349 = vunpack.c.0.s8 %v1348
        %v1350 = vperm.slane %v1344, %v1349
        %v1352 = vunpack.c.l.s4 1983009808
        %v1353 = vunpack.c.0.s8 %v1352
        %v1354 = vperm.slane %v1346, %v1353
        %v1355 = vrot.slane %v1342, 4
        %v1356 = vsel %vm995, %v1355, %v1340
        %v1357 = vrot.slane %v1340, 4
        %v1358 = vsel %vm995, %v1342, %v1357
        %v1360 = vunpack.c.l.s4 1983009808
        %v1361 = vunpack.c.0.s8 %v1360
        %v1362 = vperm.slane %v1356, %v1361
        %v1364 = vunpack.c.l.s4 1983009808
        %v1365 = vunpack.c.0.s8 %v1364
        %v1366 = vperm.slane %v1358, %v1365
        %v1367 = vrot.slane %v1362, 4
        %v1368 = vsel %vm995, %v1367, %v1350
        %v1369 = vrot.slane %v1350, 4
        %v1370 = vsel %vm995, %v1362, %v1369
        %v1372 = vunpack.c.l.s4 1934713408
        %v1373 = vunpack.c.0.s8 %v1372
        %v1374 = vperm.slane %v1368, %v1373
        %v1376 = vunpack.c.l.s4 1934713408
        %v1377 = vunpack.c.0.s8 %v1376
        %v1378 = vperm.slane %v1370, %v1377
        %v1379 = vrot.slane %v1366, 4
        %v1380 = vsel %vm995, %v1379, %v1354
        %v1381 = vrot.slane %v1354, 4
        %v1382 = vsel %vm995, %v1366, %v1381
        %v1384 = vunpack.c.l.s4 1934713408
        %v1385 = vunpack.c.0.s8 %v1384
        %v1386 = vperm.slane %v1380, %v1385
        %v1388 = vunpack.c.l.s4 1934713408
        %v1389 = vunpack.c.0.s8 %v1388
        %v1390 = vperm.slane %v1382, %v1389
        %v1391 = vrot.slane %v1374, 4
        %v1392 = vsel %vm995, 0.0, %v1391
        %v1393 = vrot.slane %v1378, 4
        %v1394 = vsel %vm995, 0.0, %v1393
        %v1395 = vrot.slane %v1386, 4
        %v1396 = vsel %vm995, 0.0, %v1395
        %v1397 = vrot.slane %v1390, 4
        %v1398 = vsel %vm995, 0.0, %v1397
        %v1399 = vsel %vm995, %v1393, %v1374
        %v1401 = vunpack.c.l.s4 1983009808
        %v1402 = vunpack.c.0.s8 %v1401
        %v1403 = vperm.slane %v1399, %v1402
        %v1404 = vrot.slane %v1394, 4
        %v1405 = vsel %vm995, %v1404, %v1392
        %v1407 = vunpack.c.l.s4 1983009808
        %v1408 = vunpack.c.0.s8 %v1407
        %v1409 = vperm.slane %v1405, %v1408
        %v1410 = vsel %vm995, %v1397, %v1386
        %v1412 = vunpack.c.l.s4 1983009808
        %v1413 = vunpack.c.0.s8 %v1412
        %v1414 = vperm.slane %v1410, %v1413
        %v1415 = vrot.slane %v1398, 4
        %v1416 = vsel %vm995, %v1415, %v1396
        %v1418 = vunpack.c.l.s4 1983009808
        %v1419 = vunpack.c.0.s8 %v1418
        %v1420 = vperm.slane %v1416, %v1419
        %v1421 = vrot.slane %v1409, 4
        %v1422 = vsel %vm995, %v1421, %v1403
        %v1423 = vrot.slane %v1403, 4
        %v1424 = vsel %vm995, %v1409, %v1423
        %v1426 = vunpack.c.l.s4 1934713408
        %v1427 = vunpack.c.0.s8 %v1426
        %v1428 = vperm.slane %v1422, %v1427
        %v1430 = vunpack.c.l.s4 1934713408
        %v1431 = vunpack.c.0.s8 %v1430
        %v1432 = vperm.slane %v1424, %v1431
        %v1433 = vrot.slane %v1420, 4
        %v1434 = vsel %vm995, %v1433, %v1414
        %v1435 = vrot.slane %v1414, 4
        %v1436 = vsel %vm995, %v1420, %v1435
        %v1438 = vunpack.c.l.s4 1934713408
        %v1439 = vunpack.c.0.s8 %v1438
        %v1440 = vperm.slane %v1434, %v1439
        %v1442 = vunpack.c.l.s4 1934713408
        %v1443 = vunpack.c.0.s8 %v1442
        %v1444 = vperm.slane %v1436, %v1443
        %v1445 = vrot.slane %v1440, 4
        %v1446 = vsel %vm995, %v1445, %v1428
        %v1447 = vrot.slane %v1428, 4
        %v1448 = vsel %vm995, %v1440, %v1447
        %v1449 = vrot.slane %v1444, 4
        %v1450 = vsel %vm995, %v1449, %v1432
        %v1451 = vrot.slane %v1432, 4
        %v1452 = vsel %vm995, %v1444, %v1451
        %1454 = vrot.lane.b32.xlu0 %v1448, 8
        %v1455 = vpop.permute.xlu0 %1454
        %1458 = vrot.lane.b32.xlu0 %v1450, 16
        %v1459 = vpop.permute.xlu0 %1458
        %1462 = vrot.lane.b32.xlu0 %v1452, 24
        %v1463 = vpop.permute.xlu0 %1462
        %v1465 = vsel %vm1117, %v1446, %v1455
        %vm1466 = vcmask 130048
        %v1467 = vsel %vm1466, %v1465, %v1459
        %vm1468 = vcmask 195584
        %v1469 = vsel %vm1468, %v1467, %v1463
        %v1470 = vpack.c.bf16 %v1469, %v1469
        %v1471 = vld [vmem:[#allocation7] sm:$0xf]
        %v1472 = vld [vmem:[#allocation7 + $0x4] sm:$0xf]
        %v1473 = vld [vmem:[#allocation7 + $0x8] sm:$0xf]
        %v1474 = vld [vmem:[#allocation7 + $0xc] sm:$0xf]
        %v1475 = vld [vmem:[%s8] sm:$0x1]
        %v1477 = vperm.slane %v1475, 0
        %v1483 = vunpack.c.l.b16 %v1471
        %v1484 = vunpack.c.l.b16 %v1472
        %v1485 = vunpack.c.l.b16 %v1473
        %v1486 = vunpack.c.l.b16 %v1474
        %v1487 = vpack.c.b16 %v1484, %v1483
        %v1488 = vpack.c.b16 %v1486, %v1485
        %v1492 = vsel %vm967, %v1470, 0
        %1494 = vmatpush.bf16.msra.mxu0 0
        %1495 = vmatpush.bf16.msra.mxu0 0
        %1496 = vmatpush.bf16.msra.mxu0 0
        %1497 = vmatpush.bf16.msra.mxu0 0
        %1498 = vmatpush.bf16.msra.mxu0 0
        %1499 = vmatpush.bf16.msra.mxu0 0
        %1500 = vmatpush.bf16.msra.mxu0 %v1488
        %1501 = vmatpush.bf16.msra.mxu0 %v1487
        %1502 = vmatmul.bf16.gmra.mxu0 %v1492
        %v1503 = vpop.f32.mrf.mxu0
        %v1504 = vadd.f32 %v1477, %v1503
        %v1505 = vpop.f32.mrf.mxu0
        %1506 = vdwg.mxu0
        %v1507 = vadd.f32 %v945, %v1504
        %v1508 = vld [vmem:[%s9] sm:$0x1]
        %v1509 = vld [vmem:[%s10] sm:$0x1]
        %v1510 = vsel %vm967, %v1507, 0.0
        %1511 = vadd.xlane.f32.xlu0 %v1510
        %v1512 = vpop.xlane.xlu0 %1511
        %v1513 = vrcp.pop 32.0
        %v1514 = vmul.f32 32.0, %v1513
        %v1515 = vsub.f32 1.0, %v1514
        %v1516 = vmul.f32 %v1513, %v1515
        %v1517 = vadd.f32 %v1513, %v1516
        %vm1518 = vweird.f32 %v1513
        %v1519 = vsel %vm1518, %v1513, %v1517
        %v1520 = vmul.f32 %v1512, %v1519
        %v1521 = vsub.f32 %v1507, %v1520
        %v1522 = vmul.f32 %v1521, %v1521
        %v1523 = vsel %vm967, %v1522, 0.0
        %1524 = vadd.xlane.f32.xlu0 %v1523
        %v1525 = vpop.xlane.xlu0 %1524
        %v1526 = vmul.f32 %v1525, %v1519
        %v1527 = vadd.f32 %v1526, 1e-05
        %v1528 = vrsqrt.pop %v1527
        %v1529 = vmul.f32 %v1528, %v1527
        %v1530 = vmul.f32 %v1529, %v1528
        %v1531 = vmul.f32 0.5, %v1530
        %v1532 = vsub.f32 1.5, %v1531
        %v1533 = vmul.f32 %v1528, %v1532
        %vm1534 = vweird.f32 %v1527
        %vm1535 = vweird.f32 %v1528
        %vm1536 = vmor %vm1534, %vm1535
        %v1537 = vsel %vm1536, %v1528, %v1533
        %v1538 = vmul.f32 %v1521, %v1537
        %v1540 = vperm.slane %v1508, 0
        %v1542 = vmul.f32 %v1538, %v1540
        %v1544 = vperm.slane %v1509, 0
        %v1546 = vadd.f32 %v1542, %v1544
        %v1547 = vpack.c.bf16 %v1546, %v1546
        %v1548 = vld [vmem:[#allocation9] sm:$0xf]
        %v1549 = vld [vmem:[#allocation9 + $0x4] sm:$0xf]
        %v1550 = vld [vmem:[#allocation9 + $0x8] sm:$0xf]
        %v1551 = vld [vmem:[#allocation9 + $0xc] sm:$0xf]
        %v1552 = vld [vmem:[%s12] sm:$0x1]
        %v1554 = vperm.slane %v1552, 0
        %v1560 = vunpack.c.l.b16 %v1548
        %v1561 = vunpack.c.l.b16 %v1549
        %v1562 = vunpack.c.l.b16 %v1550
        %v1563 = vunpack.c.l.b16 %v1551
        %v1564 = vpack.c.b16 %v1561, %v1560
        %v1565 = vpack.c.b16 %v1563, %v1562
        %v1569 = vsel %vm967, %v1547, 0
        %1571 = vmatpush.bf16.msra.mxu0 0
        %1572 = vmatpush.bf16.msra.mxu0 0
        %1573 = vmatpush.bf16.msra.mxu0 0
        %1574 = vmatpush.bf16.msra.mxu0 0
        %1575 = vmatpush.bf16.msra.mxu0 0
        %1576 = vmatpush.bf16.msra.mxu0 0
        %1577 = vmatpush.bf16.msra.mxu0 %v1565
        %1578 = vmatpush.bf16.msra.mxu0 %v1564
        %1579 = vmatmul.bf16.gmra.mxu0 %v1569
        %v1580 = vpop.f32.mrf.mxu0
        %v1581 = vadd.f32 %v1554, %v1580
        %v1582 = vpop.f32.mrf.mxu0
        %1583 = vdwg.mxu0
        %v1584 = vmax.f32 %v1581, 0.0
        %v1585 = vpack.c.bf16 %v1584, %v1584
        %v1586 = vld [vmem:[%s13] sm:$0xf]
        %v1587 = vld [vmem:[%s13 + $0x4] sm:$0xf]
        %v1588 = vld [vmem:[%s13 + $0x8] sm:$0xf]
        %v1589 = vld [vmem:[%s13 + $0xc] sm:$0xf]
        %v1590 = vld [vmem:[%s13 + $0x10] sm:$0xf]
        %v1591 = vld [vmem:[%s13 + $0x14] sm:$0xf]
        %v1592 = vld [vmem:[%s13 + $0x18] sm:$0xf]
        %v1593 = vld [vmem:[%s13 + $0x1c] sm:$0xf]
        %v1594 = vld [vmem:[%s14] sm:$0x1]
        %v1596 = vperm.slane %v1594, 0
        %v1606 = vunpack.c.l.b16 %v1586
        %v1607 = vunpack.c.l.b16 %v1587
        %v1608 = vunpack.c.l.b16 %v1588
        %v1609 = vunpack.c.l.b16 %v1589
        %v1610 = vunpack.c.l.b16 %v1590
        %v1611 = vunpack.c.l.b16 %v1591
        %v1612 = vunpack.c.l.b16 %v1592
        %v1613 = vunpack.c.l.b16 %v1593
        %v1614 = vpack.c.b16 %v1607, %v1606
        %v1615 = vpack.c.b16 %v1609, %v1608
        %v1616 = vpack.c.b16 %v1611, %v1610
        %v1617 = vpack.c.b16 %v1613, %v1612
        %vm1622 = vcmask 523264
        %v1624 = vsel %vm1622, %v1585, 0
        %1626 = vmatpush.bf16.msra.mxu0 0
        %1627 = vmatpush.bf16.msra.mxu0 0
        %1628 = vmatpush.bf16.msra.mxu0 0
        %1629 = vmatpush.bf16.msra.mxu0 0
        %1630 = vmatpush.bf16.msra.mxu0 %v1617
        %1631 = vmatpush.bf16.msra.mxu0 %v1616
        %1632 = vmatpush.bf16.msra.mxu0 %v1615
        %1633 = vmatpush.bf16.msra.mxu0 %v1614
        %1634 = vmatmul.bf16.gmra.mxu0 %v1624
        %v1635 = vpop.f32.mrf.mxu0
        %v1636 = vadd.f32 %v1596, %v1635
        %v1637 = vpop.f32.mrf.mxu0
        %1638 = vdwg.mxu0
        %v1639 = vadd.f32 %v1546, %v1636
        %v1640 = vld [vmem:[%s15] sm:$0x1]
        %v1641 = vld [vmem:[%s16] sm:$0x1]
        %v1642 = vsel %vm967, %v1639, 0.0
        %1643 = vadd.xlane.f32.xlu0 %v1642
        %v1644 = vpop.xlane.xlu0 %1643
        %v1645 = vmul.f32 %v1644, %v1519
        %v1646 = vsub.f32 %v1639, %v1645
        %v1647 = vmul.f32 %v1646, %v1646
        %v1648 = vsel %vm967, %v1647, 0.0
        %1649 = vadd.xlane.f32.xlu0 %v1648
        %v1650 = vpop.xlane.xlu0 %1649
        %v1651 = vmul.f32 %v1650, %v1519
        %v1652 = vadd.f32 %v1651, 1e-05
        %v1653 = vrsqrt.pop %v1652
        %v1654 = vmul.f32 %v1653, %v1652
        %v1655 = vmul.f32 %v1654, %v1653
        %v1656 = vmul.f32 0.5, %v1655
        %v1657 = vsub.f32 1.5, %v1656
        %v1658 = vmul.f32 %v1653, %v1657
        %vm1659 = vweird.f32 %v1652
        %vm1660 = vweird.f32 %v1653
        %vm1661 = vmor %vm1659, %vm1660
        %v1662 = vsel %vm1661, %v1653, %v1658
        %v1663 = vmul.f32 %v1646, %v1662
        %v1665 = vperm.slane %v1640, 0
        %v1667 = vmul.f32 %v1663, %v1665
        %v1669 = vperm.slane %v1641, 0
        %v1671 = vadd.f32 %v1667, %v1669
        %1672 = vst.msk [vmem:[%s603] sm:$0xff] %vm967, %v1671
        %s1673 = sand.u32 %s417, 1
        %s1674 = scalar_lea.sflag [#allocation6], %s1673
        %s1675 = sand.u32 %s417, 1
        %s1676 = smul.addr %s1675, 8
        %s1677 = scalar_lea.vmem [#allocation10], %s1676
        // Predicated region
        $region105: #{tpu_custom_call.1} parent=87 // pred_check
          %p1678 = pneg %p427
        $region106: #{tpu_custom_call.1} parent=87 // pred_check_branch
          %1680 = sbr.rel (%p1678) target = $region108
        $region107: #{tpu_custom_call.1} parent=87 // pred_region
          %1682 = vsyncadd %s1674, 0
          %s1683 = sadd.s32 %s38, %s37
          %s1684 = smul.addr %s1683, 8
          %s1685 = scalar_lea.hbm %s17, %s1684
          %s1687 = sshll.u32 %s1677, 4
          %s1688 = int_to_ptr.vmem [resolvable:$true] %s1687
          %s1689 = sshll.u32 %s1685, 4
          %s1690 = int_to_ptr.hbm [resolvable:$true] %s1689
          %1692 = dma.vmem_to_hbm [thread:$0]  %s1688, 128, %s1690, %s1674
        $region108: #{tpu_custom_call.1} parent=87 // pred_fallthru
          _
      $region88: #{tpu_custom_call.1} parent=5 // pred_fallthru
        _
      %p1693 = scmp.le.s32.totalorder 2, %s28
      // Predicated region
      $region109: #{tpu_custom_call.1} parent=5 // pred_check
        %p1694 = pneg %p1693
      $region110: #{tpu_custom_call.1} parent=5 // pred_check_branch
        %1696 = sbr.rel (%p1694) target = $region112
      $region111: #{tpu_custom_call.1} parent=5 // pred_region
        %s1697 = ssub.s32 %s28, 2
        // Predicated region
        $region113: #{tpu_custom_call.1} parent=111 // pred_check
          %p1698 = pneg %p433
        $region114: #{tpu_custom_call.1} parent=111 // pred_check_branch
          %1700 = sbr.rel (%p1698) target = $region116
        $region115: #{tpu_custom_call.1} parent=111 // pred_region
          %s1701 = sand.u32 %s418, 1
          %s1702 = scalar_lea.sflag [#allocation6], %s1701
          %s1703 = sand.u32 %s418, 1
          %s1704 = smul.addr %s1703, 8
          %s1705 = scalar_lea.vmem [#allocation10], %s1704
          %1707 = dma.done %s1702, 128
        $region116: #{tpu_custom_call.1} parent=111 // pred_fallthru
          _
      $region112: #{tpu_custom_call.1} parent=5 // pred_fallthru
        _
    $region6: #{tpu_custom_call.1} parent=1 // loop_footer
      %s32 = sadd.s32 1, %s28
    $region7: #{tpu_custom_call.1} parent=1 // loop_footer_branch
      %27 = sbr.rel target = $region3
    $region8: #{tpu_custom_call.1} parent=1 // loop_exit
      _
    %1708 = vsyncpa [#allocation5], 1
    %s1709 = scalar_lea.sflag [#allocation5], 1
    %1710 = vsyncpa %s1709, 1
    %1711 = vsyncpa [#allocation8], 1
    %1712 = vsyncpa [#allocation6], 1
    %s1713 = scalar_lea.sflag [#allocation6], 1
    %1714 = vsyncpa %s1713, 1

</llo_original>
